<compile_context>
chip_gen: v5e
topology: v5e:2x2
jax: 0.10.0
libtpu: 0.0.40
codegen_flags: <defaults>
</compile_context>

<pallas_src>
import math
import functools

import jax
import jax.numpy as jnp
from jax.experimental import pallas as pl
from jax.experimental.pallas import tpu as pltpu

_APPROX_RECIP = True   # flip to False for parity tests against the PyTorch reference


# ----------------------------- in-kernel helpers -----------------------------

def _recip(x):
    if _APPROX_RECIP:
        return pl.reciprocal(x, approx=True)
    return 1.0 / x


def _layer_norm(x, gamma, beta, eps=1e-6):
    # Matches BERT-pytorch LayerNorm: a_2 * (x - mean) / (std + eps) + b_2,
    # where torch's .std() is the *unbiased* (n-1) standard deviation.
    H = x.shape[-1]
    mean = jnp.mean(x, axis=-1, keepdims=True)
    var = jnp.sum((x - mean) ** 2, axis=-1, keepdims=True) * (1.0 / (H - 1))
    return gamma * (x - mean) * _recip(jnp.sqrt(var) + eps) + beta


def _gelu(x):
    # BERT-pytorch GELU (tanh approximation) — tanh runs on the EUP.
    return 0.5 * x * (1.0 + jnp.tanh(math.sqrt(2.0 / math.pi)
                                     * (x + 0.044715 * x ** 3)))


# ----------------------------- fused encoder kernel --------------------------

def bert_layer_kernel(x_ref, mask_ref,
                      wqkv_ref, bqkv_ref, wo_ref, bo_ref,
                      ln1g_ref, ln1b_ref, ln2g_ref, ln2b_ref,
                      w1_ref, b1_ref, w2_ref, b2_ref,
                      o_ref, *, n_heads):
    layer = pl.program_id(1)

    # At the first layer, load the embedding block into the resident f32 output block,
    # which serves as the residual-stream carry across the "layer" grid axis.
    @pl.when(layer == 0)
    def _():
        o_ref[...] = x_ref[...].astype(jnp.float32)

    x = o_ref[...]                               # (Bblk, S, H) f32 residual stream
    Bblk, S, H = x.shape
    dk = H // n_heads
    scale = 1.0 / math.sqrt(dk)
    key_valid = mask_ref[...] > 0                # (Bblk, 1, S): True where key is real

    # ---------------- self-attention sublayer:  x + Attn(LN(x)) --------------
    h = _layer_norm(x, ln1g_ref[0], ln1b_ref[0])
    h2d = h.reshape(Bblk * S, H).astype(jnp.bfloat16)

    # Fused QKV projection: one (Bblk*S, H) x (H, 3H) matmul, f32 accumulate.
    qkv = (jnp.dot(h2d, wqkv_ref[0], preferred_element_type=jnp.float32)
           + bqkv_ref[0])
    qkv = qkv.astype(jnp.bfloat16).reshape(Bblk, S, 3 * H)
    q3 = qkv[:, :, :H]                           # (Bblk, S, H)
    k3 = qkv[:, :, H:2 * H]
    v3 = qkv[:, :, 2 * H:]

    # Heads are split only at the score einsum via static lane slices (weights stay fused).
    ctx_heads = []
    for n in range(n_heads):
        lo, hi = n * dk, (n + 1) * dk
        s = jnp.einsum("bqd,bkd->bqk", q3[:, :, lo:hi], k3[:, :, lo:hi],
                       preferred_element_type=jnp.float32) * scale
        s = jnp.where(key_valid, s, -1e9)
        s = s - jnp.max(s, axis=-1, keepdims=True)
        p = jnp.exp(s)
        p = p * _recip(jnp.sum(p, axis=-1, keepdims=True))
        ctx_heads.append(
            jnp.einsum("bqk,bkd->bqd", p.astype(jnp.bfloat16), v3[:, :, lo:hi],
                       preferred_element_type=jnp.float32))
    ctx = jnp.concatenate(ctx_heads, axis=-1)    # (Bblk, S, H), lane-dense

    # Single output projection with full K = H contraction.
    ctx2d = ctx.reshape(Bblk * S, H).astype(jnp.bfloat16)
    attn = (jnp.dot(ctx2d, wo_ref[0], preferred_element_type=jnp.float32)
            + bo_ref[0])
    x = x + attn.reshape(Bblk, S, H)

    # ---------------- feed-forward sublayer:  x + FFN(LN(x)) -----------------
    h2 = _layer_norm(x, ln2g_ref[0], ln2b_ref[0])
    h2 = h2.reshape(Bblk * S, H).astype(jnp.bfloat16)
    ff = _gelu(jnp.dot(h2, w1_ref[0], preferred_element_type=jnp.float32)
               + b1_ref[0])
    ff = (jnp.dot(ff.astype(jnp.bfloat16), w2_ref[0],
                  preferred_element_type=jnp.float32) + b2_ref[0])
    x = x + ff.reshape(Bblk, S, H)

    # Carry to the next layer; the output block stays resident in VMEM across the
    # layer axis and is written back to HBM when the batch block changes.
    o_ref[...] = x


PARAM_ORDER = ("wqkv", "bqkv", "wo", "bo",
               "ln1_g", "ln1_b", "ln2_g", "ln2_b",
               "w1", "b1", "w2", "b2")


def _vmem_limit_bytes():
    # ~3/4 of physical VMEM: ~96 MiB on v5e/v6e, ~48 MiB on v7x.
    try:
        cap = int(pltpu.get_tpu_info().vmem_capacity_bytes)
    except Exception:
        cap = 64 * 1024 * 1024
    return max(32 * 1024 * 1024, (cap * 3) // 4)


def bert_encoder(x, key_mask, layers, n_heads, block_batch=None):
    B, S, H = x.shape
    L = layers["wqkv"].shape[0]
    if block_batch is None:
        block_batch = next(c for c in range(min(B, 8), 0, -1) if B % c == 0)
    Bblk = block_batch
    assert B % Bblk == 0, "batch must be divisible by the batch block size"

    def batch_map(b, l):
        return (b, 0, 0)

    def layer_map(b, l):
        return (l, 0, 0)

    in_specs = [
        pl.BlockSpec((Bblk, S, H), batch_map),   # embedding output (bf16)
        pl.BlockSpec((Bblk, 1, S), batch_map),   # key-validity mask (bf16)
    ]
    ordered = []
    for name in PARAM_ORDER:
        p = layers[name]
        ordered.append(p)
        in_specs.append(pl.BlockSpec((1,) + p.shape[1:], layer_map))

    return pl.pallas_call(
        functools.partial(bert_layer_kernel, n_heads=n_heads),
        out_shape=jax.ShapeDtypeStruct((B, S, H), jnp.float32),
        grid=(B // Bblk, L),
        in_specs=in_specs,
        out_specs=pl.BlockSpec((Bblk, S, H), batch_map),
        compiler_params=pltpu.CompilerParams(
            dimension_semantics=("parallel", "arbitrary"),
            vmem_limit_bytes=_vmem_limit_bytes(),
        ),
    )(x, key_mask, *ordered)


# ----------------------------- embedding (plain-JAX glue) --------------------
# TODO(synk): token/segment embedding gathers have no clean small Pallas equivalent;
#             they stay as plain-JAX gathers feeding the fused encoder kernel.

def sinusoidal_pos_embedding(max_len, d_model):
    position = jnp.arange(max_len, dtype=jnp.float32)[:, None]
    div_term = jnp.exp(jnp.arange(0, d_model, 2, dtype=jnp.float32)
                       * -(math.log(10000.0) / d_model))
    pe = jnp.zeros((max_len, d_model), dtype=jnp.float32)
    pe = pe.at[:, 0::2].set(jnp.sin(position * div_term))
    pe = pe.at[:, 1::2].set(jnp.cos(position * div_term))
    return pe


def bert_embedding(tokens, segments, tok_emb, seg_emb, pos_emb):
    # token + position + segment embedding; dropout == identity (eval mode)
    S = tokens.shape[1]
    return tok_emb[tokens] + pos_emb[None, :S, :] + seg_emb[segments]


# ----------------------------- parameter init --------------------------------

def init_params(key, vocab_size, hidden, n_layers, n_heads):
    ff = hidden * 4
    L = n_layers
    ks = jax.random.split(key, 6)
    bf16 = jnp.bfloat16

    def w(k, shape):
        return 0.02 * jax.random.normal(k, shape, jnp.float32)

    tok_emb = w(ks[0], (vocab_size, hidden)).at[0].set(0.0)   # padding_idx=0
    seg_emb = w(ks[1], (3, hidden)).at[0].set(0.0)            # padding_idx=0
    pos_emb = sinusoidal_pos_embedding(512, hidden)

    # Per-layer weights stacked over L.  QKV fused as (L, H, 3H) = [Wq | Wk | Wv]
    # (head n occupies columns n*dk:(n+1)*dk within each H-wide section, matching
    # torch's .view(B, S, h, dk) head split).  Matmul weights bf16, biases/LN f32.
    layers = dict(
        wqkv=w(ks[2], (L, hidden, 3 * hidden)).astype(bf16),
        bqkv=jnp.zeros((L, 1, 3 * hidden), jnp.float32),
        wo=w(ks[3], (L, hidden, hidden)).astype(bf16),
        bo=jnp.zeros((L, 1, hidden), jnp.float32),
        ln1_g=jnp.ones((L, 1, hidden), jnp.float32),
        ln1_b=jnp.zeros((L, 1, hidden), jnp.float32),
        ln2_g=jnp.ones((L, 1, hidden), jnp.float32),
        ln2_b=jnp.zeros((L, 1, hidden), jnp.float32),
        w1=w(ks[4], (L, hidden, ff)).astype(bf16),
        b1=jnp.zeros((L, 1, ff), jnp.float32),
        w2=w(ks[5], (L, ff, hidden)).astype(bf16),
        b2=jnp.zeros((L, 1, hidden), jnp.float32),
    )
    return tok_emb, seg_emb, pos_emb, layers


# ----------------------------- full BERT forward ------------------------------

def bert_forward(tokens, segments, params, n_heads, block_batch=None):
    tok_emb, seg_emb, pos_emb, layers = params

    # torch: mask = (x > 0).unsqueeze(1).repeat(1, S, 1).unsqueeze(1) -> [B,1,S,S].
    # It depends only on the key position, so pass the [B, 1, S] validity vector
    # (bf16) and broadcast inside the kernel — no [B, S, S] mask DMA.
    key_mask = (tokens > 0).astype(jnp.bfloat16)[:, None, :]

    x = bert_embedding(tokens, segments, tok_emb, seg_emb, pos_emb)
    x = x.astype(jnp.bfloat16)   # halve the (B,S,H) input DMA; residual stays f32 in-kernel
    return bert_encoder(x, key_mask, layers, n_heads, block_batch=block_batch)


# ----------------------------- main -------------------------------------------

if __name__ == "__main__":
    VOCAB = 100
    B, S, H = 2, 8, 32
    N_HEADS = 4
    N_LAYERS = 2

    key = jax.random.PRNGKey(0)
    k_tok, k_seg, k_par = jax.random.split(key, 3)

    tokens = jax.random.randint(k_tok, (B, S), 1, VOCAB, dtype=jnp.int32)
    tokens = tokens.at[:, -2:].set(0)        # some padding to exercise the mask
    segments = jax.random.randint(k_seg, (B, S), 1, 3, dtype=jnp.int32)

    params = init_params(k_par, VOCAB, H, N_LAYERS, N_HEADS)

    out = bert_forward(tokens, segments, params, N_HEADS, block_batch=2)
    out = jax.block_until_ready(out)
    assert out.shape == (B, S, H) and out.dtype == jnp.float32
    assert bool(jnp.all(jnp.isfinite(out)))
    print("KERNEL_OK")
</pallas_src>

<mosaic_0001>
module attributes {stable_mosaic.version = 11 : i64} {
  func.func @bert_layer_kernel(%arg0: i32, %arg1: i32, %arg2: memref<2x8x32xbf16, #tpu.memory_space<vmem>>, %arg3: memref<2x1x8xbf16, #tpu.memory_space<vmem>>, %arg4: memref<1x32x96xbf16, #tpu.memory_space<vmem>>, %arg5: memref<1x1x96xf32, #tpu.memory_space<vmem>>, %arg6: memref<1x32x32xbf16, #tpu.memory_space<vmem>>, %arg7: memref<1x1x32xf32, #tpu.memory_space<vmem>>, %arg8: memref<1x1x32xf32, #tpu.memory_space<vmem>>, %arg9: memref<1x1x32xf32, #tpu.memory_space<vmem>>, %arg10: memref<1x1x32xf32, #tpu.memory_space<vmem>>, %arg11: memref<1x1x32xf32, #tpu.memory_space<vmem>>, %arg12: memref<1x32x128xbf16, #tpu.memory_space<vmem>>, %arg13: memref<1x1x128xf32, #tpu.memory_space<vmem>>, %arg14: memref<1x128x32xbf16, #tpu.memory_space<vmem>>, %arg15: memref<1x1x32xf32, #tpu.memory_space<vmem>>, %arg16: memref<2x8x32xf32, #tpu.memory_space<vmem>>) attributes {dimension_semantics = [#tpu.dimension_semantics<parallel>, #tpu.dimension_semantics<arbitrary>], iteration_bounds = array<i64: 1, 2>, scalar_prefetch = 0 : i64, scratch_operands = 0 : i64, tpu.core_type = #tpu.core_type<tc>, window_params = [{transform_indices = @transform_0, window_bounds = array<i64: 2, 8, 32>}, {transform_indices = @transform_1, window_bounds = array<i64: 2, 1, 8>}, {transform_indices = @transform_2, window_bounds = array<i64: 1, 32, 96>}, {transform_indices = @transform_3, window_bounds = array<i64: 1, 1, 96>}, {transform_indices = @transform_4, window_bounds = array<i64: 1, 32, 32>}, {transform_indices = @transform_5, window_bounds = array<i64: 1, 1, 32>}, {transform_indices = @transform_6, window_bounds = array<i64: 1, 1, 32>}, {transform_indices = @transform_7, window_bounds = array<i64: 1, 1, 32>}, {transform_indices = @transform_8, window_bounds = array<i64: 1, 1, 32>}, {transform_indices = @transform_9, window_bounds = array<i64: 1, 1, 32>}, {transform_indices = @transform_10, window_bounds = array<i64: 1, 32, 128>}, {transform_indices = @transform_11, window_bounds = array<i64: 1, 1, 128>}, {transform_indices = @transform_12, window_bounds = array<i64: 1, 128, 32>}, {transform_indices = @transform_13, window_bounds = array<i64: 1, 1, 32>}, {transform_indices = @transform_14, window_bounds = array<i64: 2, 8, 32>}]} {
    %c0_i32 = arith.constant 0 : i32
    %0 = arith.cmpi eq, %arg1, %c0_i32 : i32
    %1 = arith.extui %0 : i1 to i32
    %c0_i32_0 = arith.constant 0 : i32
    %2 = arith.cmpi ne, %1, %c0_i32_0 : i32
    scf.if %2 {
      %c0_87 = arith.constant 0 : index
      %c0_88 = arith.constant 0 : index
      %c0_89 = arith.constant 0 : index
      %212 = vector.load %arg2[%c0_87, %c0_88, %c0_89] : memref<2x8x32xbf16, #tpu.memory_space<vmem>>, vector<2x8x32xbf16>
      %213 = arith.extf %212 : vector<2x8x32xbf16> to vector<2x8x32xf32>
      %c0_90 = arith.constant 0 : index
      %c0_91 = arith.constant 0 : index
      %c0_92 = arith.constant 0 : index
      %214 = vector.load %arg16[%c0_90, %c0_91, %c0_92] : memref<2x8x32xf32, #tpu.memory_space<vmem>>, vector<2x8x32xf32>
      tpu.vector_store %arg16[%c0_90, %c0_91, %c0_92], %213 {strides = array<i32>} : memref<2x8x32xf32, #tpu.memory_space<vmem>>, vector<2x8x32xf32>,
    } else {
    }
    %c0 = arith.constant 0 : index
    %c0_1 = arith.constant 0 : index
    %c0_2 = arith.constant 0 : index
    %3 = vector.load %arg16[%c0, %c0_1, %c0_2] : memref<2x8x32xf32, #tpu.memory_space<vmem>>, vector<2x8x32xf32>
    %c0_3 = arith.constant 0 : index
    %c0_4 = arith.constant 0 : index
    %c0_5 = arith.constant 0 : index
    %4 = vector.load %arg3[%c0_3, %c0_4, %c0_5] : memref<2x1x8xbf16, #tpu.memory_space<vmem>>, vector<2x1x8xbf16>
    %cst = arith.constant 0.000000e+00 : bf16
    %5 = vector.broadcast %cst : bf16 to vector<2x1x8xbf16>
    %6 = arith.cmpf ogt, %4, %5 : vector<2x1x8xbf16>
    %c0_6 = arith.constant 0 : index
    %c0_7 = arith.constant 0 : index
    %c0_8 = arith.constant 0 : index
    %7 = vector.load %arg8[%c0_6, %c0_7, %c0_8] : memref<1x1x32xf32, #tpu.memory_space<vmem>>, vector<1x1x32xf32>
    %8 = vector.shape_cast %7 : vector<1x1x32xf32> to vector<1x32xf32>
    %c0_9 = arith.constant 0 : index
    %c0_10 = arith.constant 0 : index
    %c0_11 = arith.constant 0 : index
    %9 = vector.load %arg9[%c0_9, %c0_10, %c0_11] : memref<1x1x32xf32, #tpu.memory_space<vmem>>, vector<1x1x32xf32>
    %10 = vector.shape_cast %9 : vector<1x1x32xf32> to vector<1x32xf32>
    %cst_12 = arith.constant dense<0.000000e+00> : vector<2x8xf32>
    %11 = vector.multi_reduction <add>, %3, %cst_12 [2] : vector<2x8x32xf32> to vector<2x8xf32>
    %12 = vector.shape_cast %11 : vector<2x8xf32> to vector<2x8x1xf32>
    %cst_13 = arith.constant 3.200000e+01 : f32
    %13 = vector.broadcast %cst_13 : f32 to vector<2x8x1xf32>
    %14 = arith.divf %12, %13 : vector<2x8x1xf32>
    %15 = vector.broadcast %14 : vector<2x8x1xf32> to vector<2x8x32xf32>
    %16 = arith.subf %3, %15 : vector<2x8x32xf32>
    %17 = arith.mulf %16, %16 : vector<2x8x32xf32>
    %cst_14 = arith.constant dense<0.000000e+00> : vector<2x8xf32>
    %18 = vector.multi_reduction <add>, %17, %cst_14 [2] : vector<2x8x32xf32> to vector<2x8xf32>
    %19 = vector.shape_cast %18 : vector<2x8xf32> to vector<2x8x1xf32>
    %cst_15 = arith.constant 0.0322580636 : f32
    %20 = vector.broadcast %cst_15 : f32 to vector<2x8x1xf32>
    %21 = arith.mulf %19, %20 : vector<2x8x1xf32>
    %22 = vector.broadcast %14 : vector<2x8x1xf32> to vector<2x8x32xf32>
    %23 = arith.subf %3, %22 : vector<2x8x32xf32>
    %24 = vector.shape_cast %8 : vector<1x32xf32> to vector<1x1x32xf32>
    %25 = vector.broadcast %24 : vector<1x1x32xf32> to vector<2x8x32xf32>
    %26 = arith.mulf %25, %23 : vector<2x8x32xf32>
    %27 = math.sqrt %21 : vector<2x8x1xf32>
    %cst_16 = arith.constant 9.99999997E-7 : f32
    %28 = vector.broadcast %cst_16 : f32 to vector<2x8x1xf32>
    %29 = arith.addf %27, %28 : vector<2x8x1xf32>
    %30 = tpu.reciprocal %29 {approx = true} : vector<2x8x1xf32> -> vector<2x8x1xf32>
    %31 = vector.broadcast %30 : vector<2x8x1xf32> to vector<2x8x32xf32>
    %32 = arith.mulf %26, %31 : vector<2x8x32xf32>
    %33 = vector.shape_cast %10 : vector<1x32xf32> to vector<1x1x32xf32>
    %34 = vector.broadcast %33 : vector<1x1x32xf32> to vector<2x8x32xf32>
    %35 = arith.addf %32, %34 : vector<2x8x32xf32>
    %36 = vector.shape_cast %35 : vector<2x8x32xf32> to vector<16x32xf32>
    %37 = arith.truncf %36 : vector<16x32xf32> to vector<16x32xbf16>
    %c0_17 = arith.constant 0 : index
    %c0_18 = arith.constant 0 : index
    %c0_19 = arith.constant 0 : index
    %38 = vector.load %arg4[%c0_17, %c0_18, %c0_19] : memref<1x32x96xbf16, #tpu.memory_space<vmem>>, vector<1x32x96xbf16>
    %39 = vector.shape_cast %38 : vector<1x32x96xbf16> to vector<32x96xbf16>
    %cst_20 = arith.constant dense<0.000000e+00> : vector<16x96xf32>
    %40 = tpu.matmul %37, %39, %cst_20 {dimension_numbers = #tpu.dot_dimension_numbers<[1], [0], [0], [1], [0, 0, 1, 1], [], []>} : vector<16x32xbf16>, vector<32x96xbf16>, vector<16x96xf32> -> vector<16x96xf32>
    %c0_21 = arith.constant 0 : index
    %c0_22 = arith.constant 0 : index
    %c0_23 = arith.constant 0 : index
    %41 = vector.load %arg5[%c0_21, %c0_22, %c0_23] : memref<1x1x96xf32, #tpu.memory_space<vmem>>, vector<1x1x96xf32>
    %42 = vector.shape_cast %41 : vector<1x1x96xf32> to vector<1x96xf32>
    %43 = vector.broadcast %42 : vector<1x96xf32> to vector<16x96xf32>
    %44 = arith.addf %40, %43 : vector<16x96xf32>
    %45 = arith.truncf %44 : vector<16x96xf32> to vector<16x96xbf16>
    %46 = vector.shape_cast %45 : vector<16x96xbf16> to vector<2x8x96xbf16>
    %47 = vector.extract_strided_slice %46 {offsets = [0, 0, 0], sizes = [2, 8, 32], strides = [1, 1, 1]} : vector<2x8x96xbf16> to vector<2x8x32xbf16>
    %48 = vector.extract_strided_slice %46 {offsets = [0, 0, 32], sizes = [2, 8, 32], strides = [1, 1, 1]} : vector<2x8x96xbf16> to vector<2x8x32xbf16>
    %49 = vector.extract_strided_slice %46 {offsets = [0, 0, 64], sizes = [2, 8, 32], strides = [1, 1, 1]} : vector<2x8x96xbf16> to vector<2x8x32xbf16>
    %50 = vector.extract_strided_slice %47 {offsets = [0, 0, 0], sizes = [2, 8, 8], strides = [1, 1, 1]} : vector<2x8x32xbf16> to vector<2x8x8xbf16>
    %51 = vector.extract_strided_slice %48 {offsets = [0, 0, 0], sizes = [2, 8, 8], strides = [1, 1, 1]} : vector<2x8x32xbf16> to vector<2x8x8xbf16>
    "tpu.trace_start"() <{level = 10 : i32, message = "bqd,bkd->bqk"}> : () -> ()
    %cst_24 = arith.constant dense<0.000000e+00> : vector<2x8x8xf32>
    %52 = tpu.matmul %50, %51, %cst_24 {dimension_numbers = #tpu.dot_dimension_numbers<[2], [2], [1], [1], [0, 0, 0, 1, 1, 1], [0], [0]>} : vector<2x8x8xbf16>, vector<2x8x8xbf16>, vector<2x8x8xf32> -> vector<2x8x8xf32>
    "tpu.trace_stop"() : () -> ()
    %cst_25 = arith.constant 0.353553385 : f32
    %53 = vector.broadcast %cst_25 : f32 to vector<2x8x8xf32>
    %54 = arith.mulf %52, %53 : vector<2x8x8xf32>
    %cst_26 = arith.constant -1.000000e+09 : f32
    %55 = vector.shape_cast %6 : vector<2x1x8xi1> to vector<2x1x8xi1>
    %56 = vector.broadcast %55 : vector<2x1x8xi1> to vector<2x8x8xi1>
    %57 = vector.broadcast %cst_26 : f32 to vector<2x8x8xf32>
    %58 = arith.select %56, %54, %57 : vector<2x8x8xi1>, vector<2x8x8xf32>
    %cst_27 = arith.constant dense<0xFF800000> : vector<2x8xf32>
    %59 = vector.multi_reduction <maximumf>, %58, %cst_27 [2] : vector<2x8x8xf32> to vector<2x8xf32>
    %60 = vector.shape_cast %59 : vector<2x8xf32> to vector<2x8x1xf32>
    %61 = vector.broadcast %60 : vector<2x8x1xf32> to vector<2x8x8xf32>
    %62 = arith.subf %58, %61 : vector<2x8x8xf32>
    %63 = math.exp %62 : vector<2x8x8xf32>
    %cst_28 = arith.constant dense<0.000000e+00> : vector<2x8xf32>
    %64 = vector.multi_reduction <add>, %63, %cst_28 [2] : vector<2x8x8xf32> to vector<2x8xf32>
    %65 = vector.shape_cast %64 : vector<2x8xf32> to vector<2x8x1xf32>
    %66 = tpu.reciprocal %65 {approx = true} : vector<2x8x1xf32> -> vector<2x8x1xf32>
    %67 = vector.broadcast %66 : vector<2x8x1xf32> to vector<2x8x8xf32>
    %68 = arith.mulf %63, %67 : vector<2x8x8xf32>
    %69 = arith.truncf %68 : vector<2x8x8xf32> to vector<2x8x8xbf16>
    %70 = vector.extract_strided_slice %49 {offsets = [0, 0, 0], sizes = [2, 8, 8], strides = [1, 1, 1]} : vector<2x8x32xbf16> to vector<2x8x8xbf16>
    "tpu.trace_start"() <{level = 10 : i32, message = "bqk,bkd->bqd"}> : () -> ()
    %cst_29 = arith.constant dense<0.000000e+00> : vector<2x8x8xf32>
    %71 = tpu.matmul %69, %70, %cst_29 {dimension_numbers = #tpu.dot_dimension_numbers<[2], [1], [1], [2], [0, 0, 0, 1, 1, 2], [0], [0]>} : vector<2x8x8xbf16>, vector<2x8x8xbf16>, vector<2x8x8xf32> -> vector<2x8x8xf32>
    "tpu.trace_stop"() : () -> ()
    %72 = vector.extract_strided_slice %47 {offsets = [0, 0, 8], sizes = [2, 8, 8], strides = [1, 1, 1]} : vector<2x8x32xbf16> to vector<2x8x8xbf16>
    %73 = vector.extract_strided_slice %48 {offsets = [0, 0, 8], sizes = [2, 8, 8], strides = [1, 1, 1]} : vector<2x8x32xbf16> to vector<2x8x8xbf16>
    "tpu.trace_start"() <{level = 10 : i32, message = "bqd,bkd->bqk"}> : () -> ()
    %cst_30 = arith.constant dense<0.000000e+00> : vector<2x8x8xf32>
    %74 = tpu.matmul %72, %73, %cst_30 {dimension_numbers = #tpu.dot_dimension_numbers<[2], [2], [1], [1], [0, 0, 0, 1, 1, 1], [0], [0]>} : vector<2x8x8xbf16>, vector<2x8x8xbf16>, vector<2x8x8xf32> -> vector<2x8x8xf32>
    "tpu.trace_stop"() : () -> ()
    %cst_31 = arith.constant 0.353553385 : f32
    %75 = vector.broadcast %cst_31 : f32 to vector<2x8x8xf32>
    %76 = arith.mulf %74, %75 : vector<2x8x8xf32>
    %cst_32 = arith.constant -1.000000e+09 : f32
    %77 = vector.shape_cast %6 : vector<2x1x8xi1> to vector<2x1x8xi1>
    %78 = vector.broadcast %77 : vector<2x1x8xi1> to vector<2x8x8xi1>
    %79 = vector.broadcast %cst_32 : f32 to vector<2x8x8xf32>
    %80 = arith.select %78, %76, %79 : vector<2x8x8xi1>, vector<2x8x8xf32>
    %cst_33 = arith.constant dense<0xFF800000> : vector<2x8xf32>
    %81 = vector.multi_reduction <maximumf>, %80, %cst_33 [2] : vector<2x8x8xf32> to vector<2x8xf32>
    %82 = vector.shape_cast %81 : vector<2x8xf32> to vector<2x8x1xf32>
    %83 = vector.broadcast %82 : vector<2x8x1xf32> to vector<2x8x8xf32>
    %84 = arith.subf %80, %83 : vector<2x8x8xf32>
    %85 = math.exp %84 : vector<2x8x8xf32>
    %cst_34 = arith.constant dense<0.000000e+00> : vector<2x8xf32>
    %86 = vector.multi_reduction <add>, %85, %cst_34 [2] : vector<2x8x8xf32> to vector<2x8xf32>
    %87 = vector.shape_cast %86 : vector<2x8xf32> to vector<2x8x1xf32>
    %88 = tpu.reciprocal %87 {approx = true} : vector<2x8x1xf32> -> vector<2x8x1xf32>
    %89 = vector.broadcast %88 : vector<2x8x1xf32> to vector<2x8x8xf32>
    %90 = arith.mulf %85, %89 : vector<2x8x8xf32>
    %91 = arith.truncf %90 : vector<2x8x8xf32> to vector<2x8x8xbf16>
    %92 = vector.extract_strided_slice %49 {offsets = [0, 0, 8], sizes = [2, 8, 8], strides = [1, 1, 1]} : vector<2x8x32xbf16> to vector<2x8x8xbf16>
    "tpu.trace_start"() <{level = 10 : i32, message = "bqk,bkd->bqd"}> : () -> ()
    %cst_35 = arith.constant dense<0.000000e+00> : vector<2x8x8xf32>
    %93 = tpu.matmul %91, %92, %cst_35 {dimension_numbers = #tpu.dot_dimension_numbers<[2], [1], [1], [2], [0, 0, 0, 1, 1, 2], [0], [0]>} : vector<2x8x8xbf16>, vector<2x8x8xbf16>, vector<2x8x8xf32> -> vector<2x8x8xf32>
    "tpu.trace_stop"() : () -> ()
    %94 = vector.extract_strided_slice %47 {offsets = [0, 0, 16], sizes = [2, 8, 8], strides = [1, 1, 1]} : vector<2x8x32xbf16> to vector<2x8x8xbf16>
    %95 = vector.extract_strided_slice %48 {offsets = [0, 0, 16], sizes = [2, 8, 8], strides = [1, 1, 1]} : vector<2x8x32xbf16> to vector<2x8x8xbf16>
    "tpu.trace_start"() <{level = 10 : i32, message = "bqd,bkd->bqk"}> : () -> ()
    %cst_36 = arith.constant dense<0.000000e+00> : vector<2x8x8xf32>
    %96 = tpu.matmul %94, %95, %cst_36 {dimension_numbers = #tpu.dot_dimension_numbers<[2], [2], [1], [1], [0, 0, 0, 1, 1, 1], [0], [0]>} : vector<2x8x8xbf16>, vector<2x8x8xbf16>, vector<2x8x8xf32> -> vector<2x8x8xf32>
    "tpu.trace_stop"() : () -> ()
    %cst_37 = arith.constant 0.353553385 : f32
    %97 = vector.broadcast %cst_37 : f32 to vector<2x8x8xf32>
    %98 = arith.mulf %96, %97 : vector<2x8x8xf32>
    %cst_38 = arith.constant -1.000000e+09 : f32
    %99 = vector.shape_cast %6 : vector<2x1x8xi1> to vector<2x1x8xi1>
    %100 = vector.broadcast %99 : vector<2x1x8xi1> to vector<2x8x8xi1>
    %101 = vector.broadcast %cst_38 : f32 to vector<2x8x8xf32>
    %102 = arith.select %100, %98, %101 : vector<2x8x8xi1>, vector<2x8x8xf32>
    %cst_39 = arith.constant dense<0xFF800000> : vector<2x8xf32>
    %103 = vector.multi_reduction <maximumf>, %102, %cst_39 [2] : vector<2x8x8xf32> to vector<2x8xf32>
    %104 = vector.shape_cast %103 : vector<2x8xf32> to vector<2x8x1xf32>
    %105 = vector.broadcast %104 : vector<2x8x1xf32> to vector<2x8x8xf32>
    %106 = arith.subf %102, %105 : vector<2x8x8xf32>
    %107 = math.exp %106 : vector<2x8x8xf32>
    %cst_40 = arith.constant dense<0.000000e+00> : vector<2x8xf32>
    %108 = vector.multi_reduction <add>, %107, %cst_40 [2] : vector<2x8x8xf32> to vector<2x8xf32>
    %109 = vector.shape_cast %108 : vector<2x8xf32> to vector<2x8x1xf32>
    %110 = tpu.reciprocal %109 {approx = true} : vector<2x8x1xf32> -> vector<2x8x1xf32>
    %111 = vector.broadcast %110 : vector<2x8x1xf32> to vector<2x8x8xf32>
    %112 = arith.mulf %107, %111 : vector<2x8x8xf32>
    %113 = arith.truncf %112 : vector<2x8x8xf32> to vector<2x8x8xbf16>
    %114 = vector.extract_strided_slice %49 {offsets = [0, 0, 16], sizes = [2, 8, 8], strides = [1, 1, 1]} : vector<2x8x32xbf16> to vector<2x8x8xbf16>
    "tpu.trace_start"() <{level = 10 : i32, message = "bqk,bkd->bqd"}> : () -> ()
    %cst_41 = arith.constant dense<0.000000e+00> : vector<2x8x8xf32>
    %115 = tpu.matmul %113, %114, %cst_41 {dimension_numbers = #tpu.dot_dimension_numbers<[2], [1], [1], [2], [0, 0, 0, 1, 1, 2], [0], [0]>} : vector<2x8x8xbf16>, vector<2x8x8xbf16>, vector<2x8x8xf32> -> vector<2x8x8xf32>
    "tpu.trace_stop"() : () -> ()
    %116 = vector.extract_strided_slice %47 {offsets = [0, 0, 24], sizes = [2, 8, 8], strides = [1, 1, 1]} : vector<2x8x32xbf16> to vector<2x8x8xbf16>
    %117 = vector.extract_strided_slice %48 {offsets = [0, 0, 24], sizes = [2, 8, 8], strides = [1, 1, 1]} : vector<2x8x32xbf16> to vector<2x8x8xbf16>
    "tpu.trace_start"() <{level = 10 : i32, message = "bqd,bkd->bqk"}> : () -> ()
    %cst_42 = arith.constant dense<0.000000e+00> : vector<2x8x8xf32>
    %118 = tpu.matmul %116, %117, %cst_42 {dimension_numbers = #tpu.dot_dimension_numbers<[2], [2], [1], [1], [0, 0, 0, 1, 1, 1], [0], [0]>} : vector<2x8x8xbf16>, vector<2x8x8xbf16>, vector<2x8x8xf32> -> vector<2x8x8xf32>
    "tpu.trace_stop"() : () -> ()
    %cst_43 = arith.constant 0.353553385 : f32
    %119 = vector.broadcast %cst_43 : f32 to vector<2x8x8xf32>
    %120 = arith.mulf %118, %119 : vector<2x8x8xf32>
    %cst_44 = arith.constant -1.000000e+09 : f32
    %121 = vector.shape_cast %6 : vector<2x1x8xi1> to vector<2x1x8xi1>
    %122 = vector.broadcast %121 : vector<2x1x8xi1> to vector<2x8x8xi1>
    %123 = vector.broadcast %cst_44 : f32 to vector<2x8x8xf32>
    %124 = arith.select %122, %120, %123 : vector<2x8x8xi1>, vector<2x8x8xf32>
    %cst_45 = arith.constant dense<0xFF800000> : vector<2x8xf32>
    %125 = vector.multi_reduction <maximumf>, %124, %cst_45 [2] : vector<2x8x8xf32> to vector<2x8xf32>
    %126 = vector.shape_cast %125 : vector<2x8xf32> to vector<2x8x1xf32>
    %127 = vector.broadcast %126 : vector<2x8x1xf32> to vector<2x8x8xf32>
    %128 = arith.subf %124, %127 : vector<2x8x8xf32>
    %129 = math.exp %128 : vector<2x8x8xf32>
    %cst_46 = arith.constant dense<0.000000e+00> : vector<2x8xf32>
    %130 = vector.multi_reduction <add>, %129, %cst_46 [2] : vector<2x8x8xf32> to vector<2x8xf32>
    %131 = vector.shape_cast %130 : vector<2x8xf32> to vector<2x8x1xf32>
    %132 = tpu.reciprocal %131 {approx = true} : vector<2x8x1xf32> -> vector<2x8x1xf32>
    %133 = vector.broadcast %132 : vector<2x8x1xf32> to vector<2x8x8xf32>
    %134 = arith.mulf %129, %133 : vector<2x8x8xf32>
    %135 = arith.truncf %134 : vector<2x8x8xf32> to vector<2x8x8xbf16>
    %136 = vector.extract_strided_slice %49 {offsets = [0, 0, 24], sizes = [2, 8, 8], strides = [1, 1, 1]} : vector<2x8x32xbf16> to vector<2x8x8xbf16>
    "tpu.trace_start"() <{level = 10 : i32, message = "bqk,bkd->bqd"}> : () -> ()
    %cst_47 = arith.constant dense<0.000000e+00> : vector<2x8x8xf32>
    %137 = tpu.matmul %135, %136, %cst_47 {dimension_numbers = #tpu.dot_dimension_numbers<[2], [1], [1], [2], [0, 0, 0, 1, 1, 2], [0], [0]>} : vector<2x8x8xbf16>, vector<2x8x8xbf16>, vector<2x8x8xf32> -> vector<2x8x8xf32>
    "tpu.trace_stop"() : () -> ()
    %138 = tpu.concatenate %71, %93, %115, %137 in 2 : vector<2x8x8xf32>, vector<2x8x8xf32>, vector<2x8x8xf32>, vector<2x8x8xf32> -> vector<2x8x32xf32>
    %139 = vector.shape_cast %138 : vector<2x8x32xf32> to vector<16x32xf32>
    %140 = arith.truncf %139 : vector<16x32xf32> to vector<16x32xbf16>
    %c0_48 = arith.constant 0 : index
    %c0_49 = arith.constant 0 : index
    %c0_50 = arith.constant 0 : index
    %141 = vector.load %arg6[%c0_48, %c0_49, %c0_50] : memref<1x32x32xbf16, #tpu.memory_space<vmem>>, vector<1x32x32xbf16>
    %142 = vector.shape_cast %141 : vector<1x32x32xbf16> to vector<32x32xbf16>
    %cst_51 = arith.constant dense<0.000000e+00> : vector<16x32xf32>
    %143 = tpu.matmul %140, %142, %cst_51 {dimension_numbers = #tpu.dot_dimension_numbers<[1], [0], [0], [1], [0, 0, 1, 1], [], []>} : vector<16x32xbf16>, vector<32x32xbf16>, vector<16x32xf32> -> vector<16x32xf32>
    %c0_52 = arith.constant 0 : index
    %c0_53 = arith.constant 0 : index
    %c0_54 = arith.constant 0 : index
    %144 = vector.load %arg7[%c0_52, %c0_53, %c0_54] : memref<1x1x32xf32, #tpu.memory_space<vmem>>, vector<1x1x32xf32>
    %145 = vector.shape_cast %144 : vector<1x1x32xf32> to vector<1x32xf32>
    %146 = vector.broadcast %145 : vector<1x32xf32> to vector<16x32xf32>
    %147 = arith.addf %143, %146 : vector<16x32xf32>
    %148 = vector.shape_cast %147 : vector<16x32xf32> to vector<2x8x32xf32>
    %149 = arith.addf %3, %148 : vector<2x8x32xf32>
    %c0_55 = arith.constant 0 : index
    %c0_56 = arith.constant 0 : index
    %c0_57 = arith.constant 0 : index
    %150 = vector.load %arg10[%c0_55, %c0_56, %c0_57] : memref<1x1x32xf32, #tpu.memory_space<vmem>>, vector<1x1x32xf32>
    %151 = vector.shape_cast %150 : vector<1x1x32xf32> to vector<1x32xf32>
    %c0_58 = arith.constant 0 : index
    %c0_59 = arith.constant 0 : index
    %c0_60 = arith.constant 0 : index
    %152 = vector.load %arg11[%c0_58, %c0_59, %c0_60] : memref<1x1x32xf32, #tpu.memory_space<vmem>>, vector<1x1x32xf32>
    %153 = vector.shape_cast %152 : vector<1x1x32xf32> to vector<1x32xf32>
    %cst_61 = arith.constant dense<0.000000e+00> : vector<2x8xf32>
    %154 = vector.multi_reduction <add>, %149, %cst_61 [2] : vector<2x8x32xf32> to vector<2x8xf32>
    %155 = vector.shape_cast %154 : vector<2x8xf32> to vector<2x8x1xf32>
    %cst_62 = arith.constant 3.200000e+01 : f32
    %156 = vector.broadcast %cst_62 : f32 to vector<2x8x1xf32>
    %157 = arith.divf %155, %156 : vector<2x8x1xf32>
    %158 = vector.broadcast %157 : vector<2x8x1xf32> to vector<2x8x32xf32>
    %159 = arith.subf %149, %158 : vector<2x8x32xf32>
    %160 = arith.mulf %159, %159 : vector<2x8x32xf32>
    %cst_63 = arith.constant dense<0.000000e+00> : vector<2x8xf32>
    %161 = vector.multi_reduction <add>, %160, %cst_63 [2] : vector<2x8x32xf32> to vector<2x8xf32>
    %162 = vector.shape_cast %161 : vector<2x8xf32> to vector<2x8x1xf32>
    %cst_64 = arith.constant 0.0322580636 : f32
    %163 = vector.broadcast %cst_64 : f32 to vector<2x8x1xf32>
    %164 = arith.mulf %162, %163 : vector<2x8x1xf32>
    %165 = vector.broadcast %157 : vector<2x8x1xf32> to vector<2x8x32xf32>
    %166 = arith.subf %149, %165 : vector<2x8x32xf32>
    %167 = vector.shape_cast %151 : vector<1x32xf32> to vector<1x1x32xf32>
    %168 = vector.broadcast %167 : vector<1x1x32xf32> to vector<2x8x32xf32>
    %169 = arith.mulf %168, %166 : vector<2x8x32xf32>
    %170 = math.sqrt %164 : vector<2x8x1xf32>
    %cst_65 = arith.constant 9.99999997E-7 : f32
    %171 = vector.broadcast %cst_65 : f32 to vector<2x8x1xf32>
    %172 = arith.addf %170, %171 : vector<2x8x1xf32>
    %173 = tpu.reciprocal %172 {approx = true} : vector<2x8x1xf32> -> vector<2x8x1xf32>
    %174 = vector.broadcast %173 : vector<2x8x1xf32> to vector<2x8x32xf32>
    %175 = arith.mulf %169, %174 : vector<2x8x32xf32>
    %176 = vector.shape_cast %153 : vector<1x32xf32> to vector<1x1x32xf32>
    %177 = vector.broadcast %176 : vector<1x1x32xf32> to vector<2x8x32xf32>
    %178 = arith.addf %175, %177 : vector<2x8x32xf32>
    %179 = vector.shape_cast %178 : vector<2x8x32xf32> to vector<16x32xf32>
    %180 = arith.truncf %179 : vector<16x32xf32> to vector<16x32xbf16>
    %c0_66 = arith.constant 0 : index
    %c0_67 = arith.constant 0 : index
    %c0_68 = arith.constant 0 : index
    %181 = vector.load %arg12[%c0_66, %c0_67, %c0_68] : memref<1x32x128xbf16, #tpu.memory_space<vmem>>, vector<1x32x128xbf16>
    %182 = vector.shape_cast %181 : vector<1x32x128xbf16> to vector<32x128xbf16>
    %cst_69 = arith.constant dense<0.000000e+00> : vector<16x128xf32>
    %183 = tpu.matmul %180, %182, %cst_69 {dimension_numbers = #tpu.dot_dimension_numbers<[1], [0], [0], [1], [0, 0, 1, 1], [], []>} : vector<16x32xbf16>, vector<32x128xbf16>, vector<16x128xf32> -> vector<16x128xf32>
    %c0_70 = arith.constant 0 : index
    %c0_71 = arith.constant 0 : index
    %c0_72 = arith.constant 0 : index
    %184 = vector.load %arg13[%c0_70, %c0_71, %c0_72] : memref<1x1x128xf32, #tpu.memory_space<vmem>>, vector<1x1x128xf32>
    %185 = vector.shape_cast %184 : vector<1x1x128xf32> to vector<1x128xf32>
    %186 = vector.broadcast %185 : vector<1x128xf32> to vector<16x128xf32>
    %187 = arith.addf %183, %186 : vector<16x128xf32>
    %cst_73 = arith.constant 5.000000e-01 : f32
    %188 = vector.broadcast %cst_73 : f32 to vector<16x128xf32>
    %189 = arith.mulf %188, %187 : vector<16x128xf32>
    %190 = arith.mulf %187, %187 : vector<16x128xf32>
    %191 = arith.mulf %187, %190 : vector<16x128xf32>
    %cst_74 = arith.constant 4.471500e-02 : f32
    %192 = vector.broadcast %cst_74 : f32 to vector<16x128xf32>
    %193 = arith.mulf %192, %191 : vector<16x128xf32>
    %194 = arith.addf %187, %193 : vector<16x128xf32>
    %cst_75 = arith.constant 0.797884583 : f32
    %195 = vector.broadcast %cst_75 : f32 to vector<16x128xf32>
    %196 = arith.mulf %195, %194 : vector<16x128xf32>
    %197 = math.tanh %196 : vector<16x128xf32>
    %cst_76 = arith.constant 1.000000e+00 : f32
    %198 = vector.broadcast %cst_76 : f32 to vector<16x128xf32>
    %199 = arith.addf %198, %197 : vector<16x128xf32>
    %200 = arith.mulf %189, %199 : vector<16x128xf32>
    %201 = arith.truncf %200 : vector<16x128xf32> to vector<16x128xbf16>
    %c0_77 = arith.constant 0 : index
    %c0_78 = arith.constant 0 : index
    %c0_79 = arith.constant 0 : index
    %202 = vector.load %arg14[%c0_77, %c0_78, %c0_79] : memref<1x128x32xbf16, #tpu.memory_space<vmem>>, vector<1x128x32xbf16>
    %203 = vector.shape_cast %202 : vector<1x128x32xbf16> to vector<128x32xbf16>
    %cst_80 = arith.constant dense<0.000000e+00> : vector<16x32xf32>
    %204 = tpu.matmul %201, %203, %cst_80 {dimension_numbers = #tpu.dot_dimension_numbers<[1], [0], [0], [1], [0, 0, 1, 1], [], []>} : vector<16x128xbf16>, vector<128x32xbf16>, vector<16x32xf32> -> vector<16x32xf32>
    %c0_81 = arith.constant 0 : index
    %c0_82 = arith.constant 0 : index
    %c0_83 = arith.constant 0 : index
    %205 = vector.load %arg15[%c0_81, %c0_82, %c0_83] : memref<1x1x32xf32, #tpu.memory_space<vmem>>, vector<1x1x32xf32>
    %206 = vector.shape_cast %205 : vector<1x1x32xf32> to vector<1x32xf32>
    %207 = vector.broadcast %206 : vector<1x32xf32> to vector<16x32xf32>
    %208 = arith.addf %204, %207 : vector<16x32xf32>
    %209 = vector.shape_cast %208 : vector<16x32xf32> to vector<2x8x32xf32>
    %210 = arith.addf %149, %209 : vector<2x8x32xf32>
    %c0_84 = arith.constant 0 : index
    %c0_85 = arith.constant 0 : index
    %c0_86 = arith.constant 0 : index
    %211 = vector.load %arg16[%c0_84, %c0_85, %c0_86] : memref<2x8x32xf32, #tpu.memory_space<vmem>>, vector<2x8x32xf32>
    tpu.vector_store %arg16[%c0_84, %c0_85, %c0_86], %210 {strides = array<i32>} : memref<2x8x32xf32, #tpu.memory_space<vmem>>, vector<2x8x32xf32>,
    return
  }
  func.func @transform_0(%arg0: i32, %arg1: i32) -> (i32, i32, i32) {
    %c0_i32 = arith.constant 0 : i32
    %c0_i32_0 = arith.constant 0 : i32
    %c0_i32_1 = arith.constant 0 : i32
    return %arg0, %c0_i32, %c0_i32_0 : i32, i32, i32
  }
  func.func @transform_1(%arg0: i32, %arg1: i32) -> (i32, i32, i32) {
    %c0_i32 = arith.constant 0 : i32
    %c0_i32_0 = arith.constant 0 : i32
    %c0_i32_1 = arith.constant 0 : i32
    return %arg0, %c0_i32, %c0_i32_0 : i32, i32, i32
  }
  func.func @transform_2(%arg0: i32, %arg1: i32) -> (i32, i32, i32) {
    %c0_i32 = arith.constant 0 : i32
    %c0_i32_0 = arith.constant 0 : i32
    %c0_i32_1 = arith.constant 0 : i32
    return %arg1, %c0_i32, %c0_i32_0 : i32, i32, i32
  }
  func.func @transform_3(%arg0: i32, %arg1: i32) -> (i32, i32, i32) {
    %c0_i32 = arith.constant 0 : i32
    %c0_i32_0 = arith.constant 0 : i32
    %c0_i32_1 = arith.constant 0 : i32
    return %arg1, %c0_i32, %c0_i32_0 : i32, i32, i32
  }
  func.func @transform_4(%arg0: i32, %arg1: i32) -> (i32, i32, i32) {
    %c0_i32 = arith.constant 0 : i32
    %c0_i32_0 = arith.constant 0 : i32
    %c0_i32_1 = arith.constant 0 : i32
    return %arg1, %c0_i32, %c0_i32_0 : i32, i32, i32
  }
  func.func @transform_5(%arg0: i32, %arg1: i32) -> (i32, i32, i32) {
    %c0_i32 = arith.constant 0 : i32
    %c0_i32_0 = arith.constant 0 : i32
    %c0_i32_1 = arith.constant 0 : i32
    return %arg1, %c0_i32, %c0_i32_0 : i32, i32, i32
  }
  func.func @transform_6(%arg0: i32, %arg1: i32) -> (i32, i32, i32) {
    %c0_i32 = arith.constant 0 : i32
    %c0_i32_0 = arith.constant 0 : i32
    %c0_i32_1 = arith.constant 0 : i32
    return %arg1, %c0_i32, %c0_i32_0 : i32, i32, i32
  }
  func.func @transform_7(%arg0: i32, %arg1: i32) -> (i32, i32, i32) {
    %c0_i32 = arith.constant 0 : i32
    %c0_i32_0 = arith.constant 0 : i32
    %c0_i32_1 = arith.constant 0 : i32
    return %arg1, %c0_i32, %c0_i32_0 : i32, i32, i32
  }
  func.func @transform_8(%arg0: i32, %arg1: i32) -> (i32, i32, i32) {
    %c0_i32 = arith.constant 0 : i32
    %c0_i32_0 = arith.constant 0 : i32
    %c0_i32_1 = arith.constant 0 : i32
    return %arg1, %c0_i32, %c0_i32_0 : i32, i32, i32
  }
  func.func @transform_9(%arg0: i32, %arg1: i32) -> (i32, i32, i32) {
    %c0_i32 = arith.constant 0 : i32
    %c0_i32_0 = arith.constant 0 : i32
    %c0_i32_1 = arith.constant 0 : i32
    return %arg1, %c0_i32, %c0_i32_0 : i32, i32, i32
  }
  func.func @transform_10(%arg0: i32, %arg1: i32) -> (i32, i32, i32) {
    %c0_i32 = arith.constant 0 : i32
    %c0_i32_0 = arith.constant 0 : i32
    %c0_i32_1 = arith.constant 0 : i32
    return %arg1, %c0_i32, %c0_i32_0 : i32, i32, i32
  }
  func.func @transform_11(%arg0: i32, %arg1: i32) -> (i32, i32, i32) {
    %c0_i32 = arith.constant 0 : i32
    %c0_i32_0 = arith.constant 0 : i32
    %c0_i32_1 = arith.constant 0 : i32
    return %arg1, %c0_i32, %c0_i32_0 : i32, i32, i32
  }
  func.func @transform_12(%arg0: i32, %arg1: i32) -> (i32, i32, i32) {
    %c0_i32 = arith.constant 0 : i32
    %c0_i32_0 = arith.constant 0 : i32
    %c0_i32_1 = arith.constant 0 : i32
    return %arg1, %c0_i32, %c0_i32_0 : i32, i32, i32
  }
  func.func @transform_13(%arg0: i32, %arg1: i32) -> (i32, i32, i32) {
    %c0_i32 = arith.constant 0 : i32
    %c0_i32_0 = arith.constant 0 : i32
    %c0_i32_1 = arith.constant 0 : i32
    return %arg1, %c0_i32, %c0_i32_0 : i32, i32, i32
  }
  func.func @transform_14(%arg0: i32, %arg1: i32) -> (i32, i32, i32) {
    %c0_i32 = arith.constant 0 : i32
    %c0_i32_0 = arith.constant 0 : i32
    %c0_i32_1 = arith.constant 0 : i32
    return %arg0, %c0_i32, %c0_i32_0 : i32, i32, i32
  }
}

</mosaic_0001>

<llo_original>
// kernel: tpu_custom_call.1
$region0: #{tpu_custom_call.1}
  #allocation0 [shape = 'u32[]', space=smem, size = 0x4, offset = 0x4, fixed_abs, tag = 'smem constant byte address 0x4 - core index']
  #allocation1 [shape = 'u32[72,128]{1,0:T(1,128)}', space=vmem, size = 0x9000, scoped, tag = 'internal scratch']
  %s0 = inlined_call_operand.vmem [shape: bf16[2,8,32], index: 0, kind: input, shape index: {}]
  %s1 = inlined_call_operand.vmem [shape: bf16[2,1,8], index: 1, kind: input, shape index: {}]
  %s2 = inlined_call_operand.vmem [shape: bf16[2,32,96], index: 2, kind: input, shape index: {}]
  %s3 = inlined_call_operand.vmem [shape: f32[2,1,96], index: 3, kind: input, shape index: {}]
  %s4 = inlined_call_operand.vmem [shape: bf16[2,32,32], index: 4, kind: input, shape index: {}]
  %s5 = inlined_call_operand.vmem [shape: f32[2,1,32], index: 5, kind: input, shape index: {}]
  %s6 = inlined_call_operand.vmem [shape: f32[2,1,32], index: 6, kind: input, shape index: {}]
  %s7 = inlined_call_operand.vmem [shape: f32[2,1,32], index: 7, kind: input, shape index: {}]
  %s8 = inlined_call_operand.vmem [shape: f32[2,1,32], index: 8, kind: input, shape index: {}]
  %s9 = inlined_call_operand.vmem [shape: f32[2,1,32], index: 9, kind: input, shape index: {}]
  %s10 = inlined_call_operand.vmem [shape: bf16[2,32,128], index: 10, kind: input, shape index: {}]
  %s11 = inlined_call_operand.vmem [shape: f32[2,1,128], index: 11, kind: input, shape index: {}]
  %s12 = inlined_call_operand.vmem [shape: bf16[2,128,32], index: 12, kind: input, shape index: {}]
  %s13 = inlined_call_operand.vmem [shape: f32[2,1,32], index: 13, kind: input, shape index: {}]
  %s14 = inlined_call_operand.hbm [shape: f32[2,8,32], index: 14, kind: output, shape index: {}]
  %s15 = sld [smem:[#allocation0]]
  $region93: #{tpu_custom_call.1} parent=0
    _
  %s17 = ssub.s32 1, %s15
  %s18 = scalar_select 0, %s17, %s15
  $region1: #{tpu_custom_call.1} parent=0
    #allocation2 [shape = 'u8[8192]{0}', space=vmem, size = 0x2000, scoped, tag = 'output window, operand 0, single buffered']
    #allocation3 [shape = 's32[2]{0}', space=sflag, size = 0x8, scoped, tag = 'scoped memory for tpu_custom_call.1']
    %19 = vsyncpa [#allocation3], 0
    loop: start=0, step=1, limit=4
    $region2: #{tpu_custom_call.1} parent=1 // loop_pre_header
      _
    $region3: #{tpu_custom_call.1} parent=1 // loop_header
      %s21 = sphi 0, %s25
      %p22 = scmp.ge.s32.totalorder %s21, 4
      %s28 = sphi 0, %s40
      %s29 = sphi 0, %s36
      %s30 = sphi 0, %s28
      %s31 = sphi 0, %s29
      %s32 = sphi 0, %s30
      %s33 = sphi 0, %s31
      %s43 = sphi 0, %s45
      %s46 = sphi 0, %s43
      %s47 = sphi 0, %s46
      %s63 = sphi 0, %s47
      %s69 = sphi 0, %s71
      %s72 = sphi 0, %s69
      %s73 = sphi 0, %s72
      %s89 = sphi 0, %s73
      %s95 = sphi 0, %s97
      %s98 = sphi 0, %s95
      %s99 = sphi 0, %s98
      %s115 = sphi 0, %s99
      %s121 = sphi 0, %s123
      %s124 = sphi 0, %s121
      %s125 = sphi 0, %s124
      %s141 = sphi 0, %s125
      %s147 = sphi 0, %s149
      %s150 = sphi 0, %s147
      %s151 = sphi 0, %s150
      %s167 = sphi 0, %s151
      %s173 = sphi 0, %s175
      %s176 = sphi 0, %s173
      %s177 = sphi 0, %s176
      %s193 = sphi 0, %s177
      %s199 = sphi 0, %s201
      %s202 = sphi 0, %s199
      %s203 = sphi 0, %s202
      %s219 = sphi 0, %s203
      %s225 = sphi 0, %s227
      %s228 = sphi 0, %s225
      %s229 = sphi 0, %s228
      %s245 = sphi 0, %s229
      %s251 = sphi 0, %s253
      %s254 = sphi 0, %s251
      %s255 = sphi 0, %s254
      %s271 = sphi 0, %s255
      %s277 = sphi 0, %s279
      %s280 = sphi 0, %s277
      %s281 = sphi 0, %s280
      %s297 = sphi 0, %s281
      %s303 = sphi 0, %s305
      %s306 = sphi 0, %s303
      %s307 = sphi 0, %s306
      %s323 = sphi 0, %s307
      %s329 = sphi 0, %s331
      %s332 = sphi 0, %s329
      %s333 = sphi 0, %s332
      %s349 = sphi 0, %s333
      %s355 = sphi 0, %s357
      %s358 = sphi 0, %s355
      %s359 = sphi 0, %s358
      %s375 = sphi 0, %s359
      %s381 = sphi 0, %s383
      %s384 = sphi 0, %s381
      %s385 = sphi 0, %s384
      %s401 = sphi 0, %s385
      %s407 = sphi 0, %s409
      %s410 = sphi 0, %s407
      %s411 = sphi 0, %s410
      %s427 = sphi 0, %s411
    $region4: #{tpu_custom_call.1} parent=1 // loop_header_branch
      %24 = sbr.rel (%p22) target = $region8
    $region5: #{tpu_custom_call.1} parent=1 // loop_body
      %s26 = ssub.s32 %s21, 1
      %s27 = ssub.s32 %s21, 2
      %s34 = sadd.s32 1, %s29
      %p35 = scmp.ge.s32.totalorder %s34, 2
      %s36 = scalar_select %p35, 0, %s34
      %s37 = sadd.s32 1, %s28
      %s38 = scalar_select %p35, %s37, %s28
      %p39 = scmp.ge.s32.totalorder %s38, 1
      %s40 = scalar_select %p39, 0, %s38
      %s41 = ssub.s32 %s28, %s40
      %p42 = scmp.eq.s32.totalorder %s41, 0
      %s44 = sadd.s32 %s43, 1
      %s45 = scalar_select %p42, %s43, %s44
      %p48 = pneg %p42
      %p49 = scmp.eq.s32.totalorder %s21, 1
      %p50 = por %p48, %p49
      %p51 = scmp.ne.s32.totalorder %s43, %s46
      %p52 = scmp.eq.s32.totalorder %s21, 0
      %p53 = por %p51, %p52
      %p54 = scmp.ne.s32.totalorder %s43, %s46
      %p55 = scmp.eq.s32.totalorder %s26, 1
      %p56 = por %p54, %p55
      %p57 = scmp.ne.s32.totalorder %s46, %s47
      %p58 = scmp.eq.s32.totalorder %s26, 0
      %p59 = por %p57, %p58
      %p60 = scmp.ne.s32.totalorder %s46, %s47
      %p61 = scmp.eq.s32.totalorder %s27, 1
      %p62 = por %p60, %p61
      %p64 = scmp.ne.s32.totalorder %s47, %s63
      %p65 = scmp.eq.s32.totalorder %s27, 0
      %p66 = por %p64, %p65
      %s67 = ssub.s32 %s28, %s40
      %p68 = scmp.eq.s32.totalorder %s67, 0
      %s70 = sadd.s32 %s69, 1
      %s71 = scalar_select %p68, %s69, %s70
      %p74 = pneg %p68
      %p75 = scmp.eq.s32.totalorder %s21, 1
      %p76 = por %p74, %p75
      %p77 = scmp.ne.s32.totalorder %s69, %s72
      %p78 = scmp.eq.s32.totalorder %s21, 0
      %p79 = por %p77, %p78
      %p80 = scmp.ne.s32.totalorder %s69, %s72
      %p81 = scmp.eq.s32.totalorder %s26, 1
      %p82 = por %p80, %p81
      %p83 = scmp.ne.s32.totalorder %s72, %s73
      %p84 = scmp.eq.s32.totalorder %s26, 0
      %p85 = por %p83, %p84
      %p86 = scmp.ne.s32.totalorder %s72, %s73
      %p87 = scmp.eq.s32.totalorder %s27, 1
      %p88 = por %p86, %p87
      %p90 = scmp.ne.s32.totalorder %s73, %s89
      %p91 = scmp.eq.s32.totalorder %s27, 0
      %p92 = por %p90, %p91
      %s93 = ssub.s32 %s29, %s36
      %p94 = scmp.eq.s32.totalorder %s93, 0
      %s96 = sadd.s32 %s95, 1
      %s97 = scalar_select %p94, %s95, %s96
      %p100 = pneg %p94
      %p101 = scmp.eq.s32.totalorder %s21, 1
      %p102 = por %p100, %p101
      %p103 = scmp.ne.s32.totalorder %s95, %s98
      %p104 = scmp.eq.s32.totalorder %s21, 0
      %p105 = por %p103, %p104
      %p106 = scmp.ne.s32.totalorder %s95, %s98
      %p107 = scmp.eq.s32.totalorder %s26, 1
      %p108 = por %p106, %p107
      %p109 = scmp.ne.s32.totalorder %s98, %s99
      %p110 = scmp.eq.s32.totalorder %s26, 0
      %p111 = por %p109, %p110
      %p112 = scmp.ne.s32.totalorder %s98, %s99
      %p113 = scmp.eq.s32.totalorder %s27, 1
      %p114 = por %p112, %p113
      %p116 = scmp.ne.s32.totalorder %s99, %s115
      %p117 = scmp.eq.s32.totalorder %s27, 0
      %p118 = por %p116, %p117
      %s119 = ssub.s32 %s29, %s36
      %p120 = scmp.eq.s32.totalorder %s119, 0
      %s122 = sadd.s32 %s121, 1
      %s123 = scalar_select %p120, %s121, %s122
      %p126 = pneg %p120
      %p127 = scmp.eq.s32.totalorder %s21, 1
      %p128 = por %p126, %p127
      %p129 = scmp.ne.s32.totalorder %s121, %s124
      %p130 = scmp.eq.s32.totalorder %s21, 0
      %p131 = por %p129, %p130
      %p132 = scmp.ne.s32.totalorder %s121, %s124
      %p133 = scmp.eq.s32.totalorder %s26, 1
      %p134 = por %p132, %p133
      %p135 = scmp.ne.s32.totalorder %s124, %s125
      %p136 = scmp.eq.s32.totalorder %s26, 0
      %p137 = por %p135, %p136
      %p138 = scmp.ne.s32.totalorder %s124, %s125
      %p139 = scmp.eq.s32.totalorder %s27, 1
      %p140 = por %p138, %p139
      %p142 = scmp.ne.s32.totalorder %s125, %s141
      %p143 = scmp.eq.s32.totalorder %s27, 0
      %p144 = por %p142, %p143
      %s145 = ssub.s32 %s29, %s36
      %p146 = scmp.eq.s32.totalorder %s145, 0
      %s148 = sadd.s32 %s147, 1
      %s149 = scalar_select %p146, %s147, %s148
      %p152 = pneg %p146
      %p153 = scmp.eq.s32.totalorder %s21, 1
      %p154 = por %p152, %p153
      %p155 = scmp.ne.s32.totalorder %s147, %s150
      %p156 = scmp.eq.s32.totalorder %s21, 0
      %p157 = por %p155, %p156
      %p158 = scmp.ne.s32.totalorder %s147, %s150
      %p159 = scmp.eq.s32.totalorder %s26, 1
      %p160 = por %p158, %p159
      %p161 = scmp.ne.s32.totalorder %s150, %s151
      %p162 = scmp.eq.s32.totalorder %s26, 0
      %p163 = por %p161, %p162
      %p164 = scmp.ne.s32.totalorder %s150, %s151
      %p165 = scmp.eq.s32.totalorder %s27, 1
      %p166 = por %p164, %p165
      %p168 = scmp.ne.s32.totalorder %s151, %s167
      %p169 = scmp.eq.s32.totalorder %s27, 0
      %p170 = por %p168, %p169
      %s171 = ssub.s32 %s29, %s36
      %p172 = scmp.eq.s32.totalorder %s171, 0
      %s174 = sadd.s32 %s173, 1
      %s175 = scalar_select %p172, %s173, %s174
      %p178 = pneg %p172
      %p179 = scmp.eq.s32.totalorder %s21, 1
      %p180 = por %p178, %p179
      %p181 = scmp.ne.s32.totalorder %s173, %s176
      %p182 = scmp.eq.s32.totalorder %s21, 0
      %p183 = por %p181, %p182
      %p184 = scmp.ne.s32.totalorder %s173, %s176
      %p185 = scmp.eq.s32.totalorder %s26, 1
      %p186 = por %p184, %p185
      %p187 = scmp.ne.s32.totalorder %s176, %s177
      %p188 = scmp.eq.s32.totalorder %s26, 0
      %p189 = por %p187, %p188
      %p190 = scmp.ne.s32.totalorder %s176, %s177
      %p191 = scmp.eq.s32.totalorder %s27, 1
      %p192 = por %p190, %p191
      %p194 = scmp.ne.s32.totalorder %s177, %s193
      %p195 = scmp.eq.s32.totalorder %s27, 0
      %p196 = por %p194, %p195
      %s197 = ssub.s32 %s29, %s36
      %p198 = scmp.eq.s32.totalorder %s197, 0
      %s200 = sadd.s32 %s199, 1
      %s201 = scalar_select %p198, %s199, %s200
      %p204 = pneg %p198
      %p205 = scmp.eq.s32.totalorder %s21, 1
      %p206 = por %p204, %p205
      %p207 = scmp.ne.s32.totalorder %s199, %s202
      %p208 = scmp.eq.s32.totalorder %s21, 0
      %p209 = por %p207, %p208
      %p210 = scmp.ne.s32.totalorder %s199, %s202
      %p211 = scmp.eq.s32.totalorder %s26, 1
      %p212 = por %p210, %p211
      %p213 = scmp.ne.s32.totalorder %s202, %s203
      %p214 = scmp.eq.s32.totalorder %s26, 0
      %p215 = por %p213, %p214
      %p216 = scmp.ne.s32.totalorder %s202, %s203
      %p217 = scmp.eq.s32.totalorder %s27, 1
      %p218 = por %p216, %p217
      %p220 = scmp.ne.s32.totalorder %s203, %s219
      %p221 = scmp.eq.s32.totalorder %s27, 0
      %p222 = por %p220, %p221
      %s223 = ssub.s32 %s29, %s36
      %p224 = scmp.eq.s32.totalorder %s223, 0
      %s226 = sadd.s32 %s225, 1
      %s227 = scalar_select %p224, %s225, %s226
      %p230 = pneg %p224
      %p231 = scmp.eq.s32.totalorder %s21, 1
      %p232 = por %p230, %p231
      %p233 = scmp.ne.s32.totalorder %s225, %s228
      %p234 = scmp.eq.s32.totalorder %s21, 0
      %p235 = por %p233, %p234
      %p236 = scmp.ne.s32.totalorder %s225, %s228
      %p237 = scmp.eq.s32.totalorder %s26, 1
      %p238 = por %p236, %p237
      %p239 = scmp.ne.s32.totalorder %s228, %s229
      %p240 = scmp.eq.s32.totalorder %s26, 0
      %p241 = por %p239, %p240
      %p242 = scmp.ne.s32.totalorder %s228, %s229
      %p243 = scmp.eq.s32.totalorder %s27, 1
      %p244 = por %p242, %p243
      %p246 = scmp.ne.s32.totalorder %s229, %s245
      %p247 = scmp.eq.s32.totalorder %s27, 0
      %p248 = por %p246, %p247
      %s249 = ssub.s32 %s29, %s36
      %p250 = scmp.eq.s32.totalorder %s249, 0
      %s252 = sadd.s32 %s251, 1
      %s253 = scalar_select %p250, %s251, %s252
      %p256 = pneg %p250
      %p257 = scmp.eq.s32.totalorder %s21, 1
      %p258 = por %p256, %p257
      %p259 = scmp.ne.s32.totalorder %s251, %s254
      %p260 = scmp.eq.s32.totalorder %s21, 0
      %p261 = por %p259, %p260
      %p262 = scmp.ne.s32.totalorder %s251, %s254
      %p263 = scmp.eq.s32.totalorder %s26, 1
      %p264 = por %p262, %p263
      %p265 = scmp.ne.s32.totalorder %s254, %s255
      %p266 = scmp.eq.s32.totalorder %s26, 0
      %p267 = por %p265, %p266
      %p268 = scmp.ne.s32.totalorder %s254, %s255
      %p269 = scmp.eq.s32.totalorder %s27, 1
      %p270 = por %p268, %p269
      %p272 = scmp.ne.s32.totalorder %s255, %s271
      %p273 = scmp.eq.s32.totalorder %s27, 0
      %p274 = por %p272, %p273
      %s275 = ssub.s32 %s29, %s36
      %p276 = scmp.eq.s32.totalorder %s275, 0
      %s278 = sadd.s32 %s277, 1
      %s279 = scalar_select %p276, %s277, %s278
      %p282 = pneg %p276
      %p283 = scmp.eq.s32.totalorder %s21, 1
      %p284 = por %p282, %p283
      %p285 = scmp.ne.s32.totalorder %s277, %s280
      %p286 = scmp.eq.s32.totalorder %s21, 0
      %p287 = por %p285, %p286
      %p288 = scmp.ne.s32.totalorder %s277, %s280
      %p289 = scmp.eq.s32.totalorder %s26, 1
      %p290 = por %p288, %p289
      %p291 = scmp.ne.s32.totalorder %s280, %s281
      %p292 = scmp.eq.s32.totalorder %s26, 0
      %p293 = por %p291, %p292
      %p294 = scmp.ne.s32.totalorder %s280, %s281
      %p295 = scmp.eq.s32.totalorder %s27, 1
      %p296 = por %p294, %p295
      %p298 = scmp.ne.s32.totalorder %s281, %s297
      %p299 = scmp.eq.s32.totalorder %s27, 0
      %p300 = por %p298, %p299
      %s301 = ssub.s32 %s29, %s36
      %p302 = scmp.eq.s32.totalorder %s301, 0
      %s304 = sadd.s32 %s303, 1
      %s305 = scalar_select %p302, %s303, %s304
      %p308 = pneg %p302
      %p309 = scmp.eq.s32.totalorder %s21, 1
      %p310 = por %p308, %p309
      %p311 = scmp.ne.s32.totalorder %s303, %s306
      %p312 = scmp.eq.s32.totalorder %s21, 0
      %p313 = por %p311, %p312
      %p314 = scmp.ne.s32.totalorder %s303, %s306
      %p315 = scmp.eq.s32.totalorder %s26, 1
      %p316 = por %p314, %p315
      %p317 = scmp.ne.s32.totalorder %s306, %s307
      %p318 = scmp.eq.s32.totalorder %s26, 0
      %p319 = por %p317, %p318
      %p320 = scmp.ne.s32.totalorder %s306, %s307
      %p321 = scmp.eq.s32.totalorder %s27, 1
      %p322 = por %p320, %p321
      %p324 = scmp.ne.s32.totalorder %s307, %s323
      %p325 = scmp.eq.s32.totalorder %s27, 0
      %p326 = por %p324, %p325
      %s327 = ssub.s32 %s29, %s36
      %p328 = scmp.eq.s32.totalorder %s327, 0
      %s330 = sadd.s32 %s329, 1
      %s331 = scalar_select %p328, %s329, %s330
      %p334 = pneg %p328
      %p335 = scmp.eq.s32.totalorder %s21, 1
      %p336 = por %p334, %p335
      %p337 = scmp.ne.s32.totalorder %s329, %s332
      %p338 = scmp.eq.s32.totalorder %s21, 0
      %p339 = por %p337, %p338
      %p340 = scmp.ne.s32.totalorder %s329, %s332
      %p341 = scmp.eq.s32.totalorder %s26, 1
      %p342 = por %p340, %p341
      %p343 = scmp.ne.s32.totalorder %s332, %s333
      %p344 = scmp.eq.s32.totalorder %s26, 0
      %p345 = por %p343, %p344
      %p346 = scmp.ne.s32.totalorder %s332, %s333
      %p347 = scmp.eq.s32.totalorder %s27, 1
      %p348 = por %p346, %p347
      %p350 = scmp.ne.s32.totalorder %s333, %s349
      %p351 = scmp.eq.s32.totalorder %s27, 0
      %p352 = por %p350, %p351
      %s353 = ssub.s32 %s29, %s36
      %p354 = scmp.eq.s32.totalorder %s353, 0
      %s356 = sadd.s32 %s355, 1
      %s357 = scalar_select %p354, %s355, %s356
      %p360 = pneg %p354
      %p361 = scmp.eq.s32.totalorder %s21, 1
      %p362 = por %p360, %p361
      %p363 = scmp.ne.s32.totalorder %s355, %s358
      %p364 = scmp.eq.s32.totalorder %s21, 0
      %p365 = por %p363, %p364
      %p366 = scmp.ne.s32.totalorder %s355, %s358
      %p367 = scmp.eq.s32.totalorder %s26, 1
      %p368 = por %p366, %p367
      %p369 = scmp.ne.s32.totalorder %s358, %s359
      %p370 = scmp.eq.s32.totalorder %s26, 0
      %p371 = por %p369, %p370
      %p372 = scmp.ne.s32.totalorder %s358, %s359
      %p373 = scmp.eq.s32.totalorder %s27, 1
      %p374 = por %p372, %p373
      %p376 = scmp.ne.s32.totalorder %s359, %s375
      %p377 = scmp.eq.s32.totalorder %s27, 0
      %p378 = por %p376, %p377
      %s379 = ssub.s32 %s29, %s36
      %p380 = scmp.eq.s32.totalorder %s379, 0
      %s382 = sadd.s32 %s381, 1
      %s383 = scalar_select %p380, %s381, %s382
      %p386 = pneg %p380
      %p387 = scmp.eq.s32.totalorder %s21, 1
      %p388 = por %p386, %p387
      %p389 = scmp.ne.s32.totalorder %s381, %s384
      %p390 = scmp.eq.s32.totalorder %s21, 0
      %p391 = por %p389, %p390
      %p392 = scmp.ne.s32.totalorder %s381, %s384
      %p393 = scmp.eq.s32.totalorder %s26, 1
      %p394 = por %p392, %p393
      %p395 = scmp.ne.s32.totalorder %s384, %s385
      %p396 = scmp.eq.s32.totalorder %s26, 0
      %p397 = por %p395, %p396
      %p398 = scmp.ne.s32.totalorder %s384, %s385
      %p399 = scmp.eq.s32.totalorder %s27, 1
      %p400 = por %p398, %p399
      %p402 = scmp.ne.s32.totalorder %s385, %s401
      %p403 = scmp.eq.s32.totalorder %s27, 0
      %p404 = por %p402, %p403
      %s405 = ssub.s32 %s28, %s40
      %p406 = scmp.eq.s32.totalorder %s405, 0
      %s408 = sadd.s32 %s407, 1
      %s409 = scalar_select %p406, %s407, %s408
      %p412 = pneg %p406
      %p413 = scmp.eq.s32.totalorder %s21, 1
      %p414 = por %p412, %p413
      %p415 = scmp.ne.s32.totalorder %s407, %s410
      %p416 = scmp.eq.s32.totalorder %s21, 0
      %p417 = por %p415, %p416
      %p418 = scmp.ne.s32.totalorder %s407, %s410
      %p419 = scmp.eq.s32.totalorder %s26, 1
      %p420 = por %p418, %p419
      %p421 = scmp.ne.s32.totalorder %s410, %s411
      %p422 = scmp.eq.s32.totalorder %s26, 0
      %p423 = por %p421, %p422
      %p424 = scmp.ne.s32.totalorder %s410, %s411
      %p425 = scmp.eq.s32.totalorder %s27, 1
      %p426 = por %p424, %p425
      %p428 = scmp.ne.s32.totalorder %s411, %s427
      %p429 = scmp.eq.s32.totalorder %s27, 0
      %p430 = por %p428, %p429
      %p431 = scmp.le.s32.totalorder 1, %s21
      %p432 = scmp.lt.s32.totalorder %s21, 3
      %p433 = pnand %p431, %p432
      %p434 = pneg %p433
      // Predicated region
      $region9: #{tpu_custom_call.1} parent=5 // pred_check
        _
      $region10: #{tpu_custom_call.1} parent=5 // pred_check_branch
        %436 = sbr.rel (%p433) target = $region12
      $region11: #{tpu_custom_call.1} parent=5 // pred_region
        %s437 = ssub.s32 %s21, 1
        // Predicated region
        $region13: #{tpu_custom_call.1} parent=11 // pred_check
          %p438 = pneg %p59
        $region14: #{tpu_custom_call.1} parent=11 // pred_check_branch
          %440 = sbr.rel (%p438) target = $region16
        $region15: #{tpu_custom_call.1} parent=11 // pred_region
          %s441 = smul.u32 2, %s30
          %p442 = scmp.lt.s32.totalorder %s441, 1
          %s443 = scalar_select %p442, %s441, 1
          %s444 = smul.addr %s443, 4
          %s445 = scalar_lea.vmem %s0, %s444
          %s446 = smul.u32 2, %s30
        $region16: #{tpu_custom_call.1} parent=11 // pred_fallthru
          _
        // Predicated region
        $region17: #{tpu_custom_call.1} parent=11 // pred_check
          %p447 = pneg %p85
        $region18: #{tpu_custom_call.1} parent=11 // pred_check_branch
          %449 = sbr.rel (%p447) target = $region20
        $region19: #{tpu_custom_call.1} parent=11 // pred_region
          %s450 = smul.u32 2, %s30
          %p451 = scmp.lt.s32.totalorder %s450, 1
          %s452 = scalar_select %p451, %s450, 1
          %s453 = scalar_lea.vmem %s1, %s452
          %s454 = smul.u32 2, %s30
        $region20: #{tpu_custom_call.1} parent=11 // pred_fallthru
          _
      $region12: #{tpu_custom_call.1} parent=5 // pred_fallthru
        _
      %p455 = scmp.lt.s32.totalorder %s21, 2
      // Predicated region
      $region21: #{tpu_custom_call.1} parent=5 // pred_check
        %p456 = pneg %p455
      $region22: #{tpu_custom_call.1} parent=5 // pred_check_branch
        %458 = sbr.rel (%p456) target = $region24
      $region23: #{tpu_custom_call.1} parent=5 // pred_region
        // Predicated region
        $region25: #{tpu_custom_call.1} parent=23 // pred_check
          %p459 = pneg %p105
        $region26: #{tpu_custom_call.1} parent=23 // pred_check_branch
          %461 = sbr.rel (%p459) target = $region28
        $region27: #{tpu_custom_call.1} parent=23 // pred_region
          %p462 = scmp.lt.s32.totalorder %s29, 1
          %s463 = scalar_select %p462, %s29, 1
          %s464 = smul.addr %s463, 4
          %s465 = smul.addr %s464, 4
          %s466 = scalar_lea.vmem %s2, %s465
        $region28: #{tpu_custom_call.1} parent=23 // pred_fallthru
          _
        // Predicated region
        $region29: #{tpu_custom_call.1} parent=23 // pred_check
          %p467 = pneg %p131
        $region30: #{tpu_custom_call.1} parent=23 // pred_check_branch
          %469 = sbr.rel (%p467) target = $region32
        $region31: #{tpu_custom_call.1} parent=23 // pred_region
          %p470 = scmp.lt.s32.totalorder %s29, 1
          %s471 = scalar_select %p470, %s29, 1
          %s472 = scalar_lea.vmem %s3, %s471
        $region32: #{tpu_custom_call.1} parent=23 // pred_fallthru
          _
        // Predicated region
        $region33: #{tpu_custom_call.1} parent=23 // pred_check
          %p473 = pneg %p157
        $region34: #{tpu_custom_call.1} parent=23 // pred_check_branch
          %475 = sbr.rel (%p473) target = $region36
        $region35: #{tpu_custom_call.1} parent=23 // pred_region
          %p476 = scmp.lt.s32.totalorder %s29, 1
          %s477 = scalar_select %p476, %s29, 1
          %s478 = smul.addr %s477, 4
          %s479 = smul.addr %s478, 4
          %s480 = scalar_lea.vmem %s4, %s479
        $region36: #{tpu_custom_call.1} parent=23 // pred_fallthru
          _
        // Predicated region
        $region37: #{tpu_custom_call.1} parent=23 // pred_check
          %p481 = pneg %p183
        $region38: #{tpu_custom_call.1} parent=23 // pred_check_branch
          %483 = sbr.rel (%p481) target = $region40
        $region39: #{tpu_custom_call.1} parent=23 // pred_region
          %p484 = scmp.lt.s32.totalorder %s29, 1
          %s485 = scalar_select %p484, %s29, 1
          %s486 = scalar_lea.vmem %s5, %s485
        $region40: #{tpu_custom_call.1} parent=23 // pred_fallthru
          _
        // Predicated region
        $region41: #{tpu_custom_call.1} parent=23 // pred_check
          %p487 = pneg %p209
        $region42: #{tpu_custom_call.1} parent=23 // pred_check_branch
          %489 = sbr.rel (%p487) target = $region44
        $region43: #{tpu_custom_call.1} parent=23 // pred_region
          %p490 = scmp.lt.s32.totalorder %s29, 1
          %s491 = scalar_select %p490, %s29, 1
          %s492 = scalar_lea.vmem %s6, %s491
        $region44: #{tpu_custom_call.1} parent=23 // pred_fallthru
          _
        // Predicated region
        $region45: #{tpu_custom_call.1} parent=23 // pred_check
          %p493 = pneg %p235
        $region46: #{tpu_custom_call.1} parent=23 // pred_check_branch
          %495 = sbr.rel (%p493) target = $region48
        $region47: #{tpu_custom_call.1} parent=23 // pred_region
          %p496 = scmp.lt.s32.totalorder %s29, 1
          %s497 = scalar_select %p496, %s29, 1
          %s498 = scalar_lea.vmem %s7, %s497
        $region48: #{tpu_custom_call.1} parent=23 // pred_fallthru
          _
        // Predicated region
        $region49: #{tpu_custom_call.1} parent=23 // pred_check
          %p499 = pneg %p261
        $region50: #{tpu_custom_call.1} parent=23 // pred_check_branch
          %501 = sbr.rel (%p499) target = $region52
        $region51: #{tpu_custom_call.1} parent=23 // pred_region
          %p502 = scmp.lt.s32.totalorder %s29, 1
          %s503 = scalar_select %p502, %s29, 1
          %s504 = scalar_lea.vmem %s8, %s503
        $region52: #{tpu_custom_call.1} parent=23 // pred_fallthru
          _
        // Predicated region
        $region53: #{tpu_custom_call.1} parent=23 // pred_check
          %p505 = pneg %p287
        $region54: #{tpu_custom_call.1} parent=23 // pred_check_branch
          %507 = sbr.rel (%p505) target = $region56
        $region55: #{tpu_custom_call.1} parent=23 // pred_region
          %p508 = scmp.lt.s32.totalorder %s29, 1
          %s509 = scalar_select %p508, %s29, 1
          %s510 = scalar_lea.vmem %s9, %s509
        $region56: #{tpu_custom_call.1} parent=23 // pred_fallthru
          _
        // Predicated region
        $region57: #{tpu_custom_call.1} parent=23 // pred_check
          %p511 = pneg %p313
        $region58: #{tpu_custom_call.1} parent=23 // pred_check_branch
          %513 = sbr.rel (%p511) target = $region60
        $region59: #{tpu_custom_call.1} parent=23 // pred_region
          %p514 = scmp.lt.s32.totalorder %s29, 1
          %s515 = scalar_select %p514, %s29, 1
          %s516 = smul.addr %s515, 4
          %s517 = smul.addr %s516, 4
          %s518 = scalar_lea.vmem %s10, %s517
        $region60: #{tpu_custom_call.1} parent=23 // pred_fallthru
          _
        // Predicated region
        $region61: #{tpu_custom_call.1} parent=23 // pred_check
          %p519 = pneg %p339
        $region62: #{tpu_custom_call.1} parent=23 // pred_check_branch
          %521 = sbr.rel (%p519) target = $region64
        $region63: #{tpu_custom_call.1} parent=23 // pred_region
          %p522 = scmp.lt.s32.totalorder %s29, 1
          %s523 = scalar_select %p522, %s29, 1
          %s524 = scalar_lea.vmem %s11, %s523
        $region64: #{tpu_custom_call.1} parent=23 // pred_fallthru
          _
        // Predicated region
        $region65: #{tpu_custom_call.1} parent=23 // pred_check
          %p525 = pneg %p365
        $region66: #{tpu_custom_call.1} parent=23 // pred_check_branch
          %527 = sbr.rel (%p525) target = $region68
        $region67: #{tpu_custom_call.1} parent=23 // pred_region
          %p528 = scmp.lt.s32.totalorder %s29, 1
          %s529 = scalar_select %p528, %s29, 1
          %s530 = smul.addr %s529, 16
          %s531 = smul.addr %s530, 4
          %s532 = scalar_lea.vmem %s12, %s531
        $region68: #{tpu_custom_call.1} parent=23 // pred_fallthru
          _
        // Predicated region
        $region69: #{tpu_custom_call.1} parent=23 // pred_check
          %p533 = pneg %p391
        $region70: #{tpu_custom_call.1} parent=23 // pred_check_branch
          %535 = sbr.rel (%p533) target = $region72
        $region71: #{tpu_custom_call.1} parent=23 // pred_region
          %p536 = scmp.lt.s32.totalorder %s29, 1
          %s537 = scalar_select %p536, %s29, 1
          %s538 = scalar_lea.vmem %s13, %s537
        $region72: #{tpu_custom_call.1} parent=23 // pred_fallthru
          _
      $region24: #{tpu_custom_call.1} parent=5 // pred_fallthru
        _
      %p539 = scmp.le.s32.totalorder 1, %s21
      %p540 = scmp.lt.s32.totalorder %s21, 3
      %p541 = pnand %p539, %p540
      %p542 = pneg %p541
      // Predicated region
      $region73: #{tpu_custom_call.1} parent=5 // pred_check
        _
      $region74: #{tpu_custom_call.1} parent=5 // pred_check_branch
        %544 = sbr.rel (%p541) target = $region76
      $region75: #{tpu_custom_call.1} parent=5 // pred_region
        %s545 = ssub.s32 %s21, 1
        %s546 = smul.u32 2, %s30
        %p547 = scmp.lt.s32.totalorder %s546, 1
        %s548 = scalar_select %p547, %s546, 1
        %s549 = smul.addr %s548, 4
        %s550 = scalar_lea.vmem %s0, %s549
        %p551 = pneg %p59
        %p552 = pneg %p56
        %s553 = smul.u32 2, %s30
        %p554 = scmp.lt.s32.totalorder %s553, 1
        %s555 = scalar_select %p554, %s553, 1
        %s556 = scalar_lea.vmem %s1, %s555
        %p557 = pneg %p85
        %p558 = pneg %p82
        %p559 = scmp.lt.s32.totalorder %s31, 1
        %s560 = scalar_select %p559, %s31, 1
        %s561 = smul.addr %s560, 4
        %s562 = smul.addr %s561, 4
        %s563 = scalar_lea.vmem %s2, %s562
        %p564 = pneg %p111
        %p565 = pneg %p108
        %p566 = scmp.lt.s32.totalorder %s31, 1
        %s567 = scalar_select %p566, %s31, 1
        %s568 = scalar_lea.vmem %s3, %s567
        %p569 = pneg %p137
        %p570 = pneg %p134
        %p571 = scmp.lt.s32.totalorder %s31, 1
        %s572 = scalar_select %p571, %s31, 1
        %s573 = smul.addr %s572, 4
        %s574 = smul.addr %s573, 4
        %s575 = scalar_lea.vmem %s4, %s574
        %p576 = pneg %p163
        %p577 = pneg %p160
        %p578 = scmp.lt.s32.totalorder %s31, 1
        %s579 = scalar_select %p578, %s31, 1
        %s580 = scalar_lea.vmem %s5, %s579
        %p581 = pneg %p189
        %p582 = pneg %p186
        %p583 = scmp.lt.s32.totalorder %s31, 1
        %s584 = scalar_select %p583, %s31, 1
        %s585 = scalar_lea.vmem %s6, %s584
        %p586 = pneg %p215
        %p587 = pneg %p212
        %p588 = scmp.lt.s32.totalorder %s31, 1
        %s589 = scalar_select %p588, %s31, 1
        %s590 = scalar_lea.vmem %s7, %s589
        %p591 = pneg %p241
        %p592 = pneg %p238
        %p593 = scmp.lt.s32.totalorder %s31, 1
        %s594 = scalar_select %p593, %s31, 1
        %s595 = scalar_lea.vmem %s8, %s594
        %p596 = pneg %p267
        %p597 = pneg %p264
        %p598 = scmp.lt.s32.totalorder %s31, 1
        %s599 = scalar_select %p598, %s31, 1
        %s600 = scalar_lea.vmem %s9, %s599
        %p601 = pneg %p293
        %p602 = pneg %p290
        %p603 = scmp.lt.s32.totalorder %s31, 1
        %s604 = scalar_select %p603, %s31, 1
        %s605 = smul.addr %s604, 4
        %s606 = smul.addr %s605, 4
        %s607 = scalar_lea.vmem %s10, %s606
        %p608 = pneg %p319
        %p609 = pneg %p316
        %p610 = scmp.lt.s32.totalorder %s31, 1
        %s611 = scalar_select %p610, %s31, 1
        %s612 = scalar_lea.vmem %s11, %s611
        %p613 = pneg %p345
        %p614 = pneg %p342
        %p615 = scmp.lt.s32.totalorder %s31, 1
        %s616 = scalar_select %p615, %s31, 1
        %s617 = smul.addr %s616, 16
        %s618 = smul.addr %s617, 4
        %s619 = scalar_lea.vmem %s12, %s618
        %p620 = pneg %p371
        %p621 = pneg %p368
        %p622 = scmp.lt.s32.totalorder %s31, 1
        %s623 = scalar_select %p622, %s31, 1
        %s624 = scalar_lea.vmem %s13, %s623
        %p625 = pneg %p397
        %p626 = pneg %p394
        %p627 = pneg %p423
        %p628 = pneg %p420
        %s629 = smul.u32 2, %s30
        %p630 = scmp.lt.s32.totalorder %s629, 1
        %s631 = scalar_select %p630, %s629, 1
        %s632 = smul.addr %s631, 4
        %s633 = scalar_lea.vmem %s0, %s632
        %s634 = smul.u32 2, %s30
        %s635 = smul.u32 2, %s30
        %p636 = scmp.lt.s32.totalorder %s635, 1
        %s637 = scalar_select %p636, %s635, 1
        %s638 = scalar_lea.vmem %s1, %s637
        %s639 = smul.u32 2, %s30
        %p640 = scmp.lt.s32.totalorder %s31, 1
        %s641 = scalar_select %p640, %s31, 1
        %s642 = smul.addr %s641, 4
        %s643 = smul.addr %s642, 4
        %s644 = scalar_lea.vmem %s2, %s643
        %p645 = scmp.lt.s32.totalorder %s31, 1
        %s646 = scalar_select %p645, %s31, 1
        %s647 = scalar_lea.vmem %s3, %s646
        %p648 = scmp.lt.s32.totalorder %s31, 1
        %s649 = scalar_select %p648, %s31, 1
        %s650 = smul.addr %s649, 4
        %s651 = smul.addr %s650, 4
        %s652 = scalar_lea.vmem %s4, %s651
        %p653 = scmp.lt.s32.totalorder %s31, 1
        %s654 = scalar_select %p653, %s31, 1
        %s655 = scalar_lea.vmem %s5, %s654
        %p656 = scmp.lt.s32.totalorder %s31, 1
        %s657 = scalar_select %p656, %s31, 1
        %s658 = scalar_lea.vmem %s6, %s657
        %p659 = scmp.lt.s32.totalorder %s31, 1
        %s660 = scalar_select %p659, %s31, 1
        %s661 = scalar_lea.vmem %s7, %s660
        %p662 = scmp.lt.s32.totalorder %s31, 1
        %s663 = scalar_select %p662, %s31, 1
        %s664 = scalar_lea.vmem %s8, %s663
        %p665 = scmp.lt.s32.totalorder %s31, 1
        %s666 = scalar_select %p665, %s31, 1
        %s667 = scalar_lea.vmem %s9, %s666
        %p668 = scmp.lt.s32.totalorder %s31, 1
        %s669 = scalar_select %p668, %s31, 1
        %s670 = smul.addr %s669, 4
        %s671 = smul.addr %s670, 4
        %s672 = scalar_lea.vmem %s10, %s671
        %p673 = scmp.lt.s32.totalorder %s31, 1
        %s674 = scalar_select %p673, %s31, 1
        %s675 = scalar_lea.vmem %s11, %s674
        %p676 = scmp.lt.s32.totalorder %s31, 1
        %s677 = scalar_select %p676, %s31, 1
        %s678 = smul.addr %s677, 16
        %s679 = smul.addr %s678, 4
        %s680 = scalar_lea.vmem %s12, %s679
        %p681 = scmp.lt.s32.totalorder %s31, 1
        %s682 = scalar_select %p681, %s31, 1
        %s683 = scalar_lea.vmem %s13, %s682
        %s684 = smul.u32 2, %s30
        %p686 = scmp.eq.s32.totalorder %s31, 0
        // Predicated region
        $region77: #{tpu_custom_call.1} parent=75 // pred_check
          %p687 = pneg %p686
        $region78: #{tpu_custom_call.1} parent=75 // pred_check_branch
          %689 = sbr.rel (%p687) target = $region80
        $region79: #{tpu_custom_call.1} parent=75 // pred_region
          %v690 = vld [vmem:[%s633] sm:$0xf]
          %v691 = vld [vmem:[%s633 + $0x4] sm:$0xf]
          %v692 = vunpack.c.l.bf16 %v690
          %v693 = vunpack.c.l.bf16 %v691
          %vm694 = vcmask 261120
          %695 = vst.msk [vmem:[#allocation2] sm:$0xff] %vm694, %v692
          %696 = vst.msk [vmem:[#allocation2 + $0x8] sm:$0xff] %vm694, %v693
        $region80: #{tpu_custom_call.1} parent=75 // pred_fallthru
          _
        %v697 = vld [vmem:[#allocation2] sm:$0xff]
        %v698 = vld [vmem:[#allocation2 + $0x8] sm:$0xff]
        %v699 = vld [vmem:[%s638] sm:$0x1]
        %v700 = vld [vmem:[%s638 + $0x1] sm:$0x1]
        %v701 = vunpack.c.l.bf16 %v699
        %v702 = vunpack.c.l.bf16 %v700
        %vm703 = vcmp.gt.f32.partialorder %v701, 0.0
        %vm704 = vcmp.gt.f32.partialorder %v702, 0.0
        %v705 = vld [vmem:[%s658] sm:$0x1]
        %v706 = vld [vmem:[%s661] sm:$0x1]
        %vm707 = vcmask 261120
        %v708 = vsel %vm707, %v697, 0.0
        %709 = vadd.xlane.f32.xlu0 %v708
        %v710 = vpop.xlane.xlu0 %709
        %v711 = vsel %vm707, %v698, 0.0
        %712 = vadd.xlane.f32.xlu0 %v711
        %v713 = vpop.xlane.xlu0 %712
        %v714 = vrcp.pop 32.0
        %v715 = vmul.f32 32.0, %v714
        %v716 = vsub.f32 1.0, %v715
        %v717 = vmul.f32 %v714, %v716
        %v718 = vadd.f32 %v714, %v717
        %vm719 = vweird.f32 %v714
        %v720 = vsel %vm719, %v714, %v718
        %v721 = vmul.f32 %v710, %v720
        %v722 = vmul.f32 %v713, %v720
        %v723 = vsub.f32 %v697, %v721
        %v724 = vsub.f32 %v698, %v722
        %v725 = vmul.f32 %v723, %v723
        %v726 = vmul.f32 %v724, %v724
        %v727 = vsel %vm707, %v725, 0.0
        %728 = vadd.xlane.f32.xlu0 %v727
        %v729 = vpop.xlane.xlu0 %728
        %v730 = vsel %vm707, %v726, 0.0
        %731 = vadd.xlane.f32.xlu0 %v730
        %v732 = vpop.xlane.xlu0 %731
        %v733 = vmul.f32 %v729, 0.032258064
        %v734 = vmul.f32 %v732, 0.032258064
        %v736 = vperm.slane %v705, 0
        %v738 = vmul.f32 %v736, %v723
        %v739 = vmul.f32 %v736, %v724
        %v740 = vrsqrt.pop %v733
        %v741 = vmul.f32 %v740, %v733
        %v742 = vmul.f32 %v741, %v740
        %v743 = vmul.f32 0.5, %v742
        %v744 = vsub.f32 1.5, %v743
        %v745 = vmul.f32 %v740, %v744
        %v746 = vmul.f32 %v733, %v745
        %vm747 = vcmp.eq.f32.partialorder %v733, inf
        %v748 = vsel %vm747, %v733, %v746
        %vm749 = vcmp.eq.f32.partialorder %v733, 0.0
        %v750 = vand.u32 %v733, 2147483648
        %v751 = vsel %vm749, %v750, %v748
        %v752 = vrsqrt.pop %v734
        %v753 = vmul.f32 %v752, %v734
        %v754 = vmul.f32 %v753, %v752
        %v755 = vmul.f32 0.5, %v754
        %v756 = vsub.f32 1.5, %v755
        %v757 = vmul.f32 %v752, %v756
        %v758 = vmul.f32 %v734, %v757
        %vm759 = vcmp.eq.f32.partialorder %v734, inf
        %v760 = vsel %vm759, %v734, %v758
        %vm761 = vcmp.eq.f32.partialorder %v734, 0.0
        %v762 = vand.u32 %v734, 2147483648
        %v763 = vsel %vm761, %v762, %v760
        %v764 = vadd.f32 %v751, 1e-06
        %v765 = vadd.f32 %v763, 1e-06
        %v766 = vrcp.pop %v764
        %v767 = vrcp.pop %v765
        %v768 = vmul.f32 %v738, %v766
        %v769 = vmul.f32 %v739, %v767
        %v771 = vperm.slane %v706, 0
        %v773 = vadd.f32 %v768, %v771
        %v774 = vadd.f32 %v769, %v771
        %v775 = vpack.c.bf16 %v774, %v773
        %v776 = vld [vmem:[%s644] sm:$0xf]
        %v777 = vld [vmem:[%s644 + $0x4] sm:$0xf]
        %v778 = vld [vmem:[%s644 + $0x8] sm:$0xf]
        %v779 = vld [vmem:[%s644 + $0xc] sm:$0xf]
        %v780 = vld [vmem:[%s647] sm:$0x1]
        %v782 = vperm.slane %v780, 0
        %v788 = vunpack.c.l.b16 %v776
        %v789 = vunpack.c.l.b16 %v777
        %v790 = vunpack.c.l.b16 %v778
        %v791 = vunpack.c.l.b16 %v779
        %v792 = vpack.c.b16 %v789, %v788
        %v793 = vpack.c.b16 %v791, %v790
        %v797 = vsel %vm707, %v775, 0
        %799 = vmatpush.bf16.msra.mxu0 0
        %800 = vmatpush.bf16.msra.mxu0 0
        %801 = vmatpush.bf16.msra.mxu0 0
        %802 = vmatpush.bf16.msra.mxu0 0
        %803 = vmatpush.bf16.msra.mxu0 0
        %804 = vmatpush.bf16.msra.mxu0 0
        %805 = vmatpush.bf16.msra.mxu0 %v793
        %806 = vmatpush.bf16.msra.mxu0 %v792
        %807 = vmatmul.bf16.gmra.mxu0 %v797
        %v808 = vpop.f32.mrf.mxu0
        %v809 = vadd.f32 %v782, %v808
        %v810 = vpop.f32.mrf.mxu0
        %v811 = vadd.f32 %v782, %v810
        %812 = vdwg.mxu0
        %v813 = vpack.c.bf16 %v809, %v809
        %v814 = vpack.c.bf16 %v811, %v811
        %v816 = vunpack.c.l.b16 %v813
        %v817 = vpack.c.b16 %v816, %v816
        %818 = vrot.lane.b32.xlu0 %v817, 96
        %v819 = vpop.permute.xlu0 %818
        %vm820 = vcmask 64512
        %v822 = vsel %vm820, %v813, 0
        %v825 = vsel %vm820, %v819, 0
        %827 = vmatpush.bf16.xpose.msra.mxu0 0
        %828 = vmatpush.bf16.xpose.msra.mxu0 0
        %829 = vmatpush.bf16.xpose.msra.mxu0 0
        %830 = vmatpush.bf16.xpose.msra.mxu0 0
        %831 = vmatpush.bf16.xpose.msra.mxu0 0
        %832 = vmatpush.bf16.xpose.msra.mxu0 0
        %833 = vmatpush.bf16.xpose.msra.mxu0 0
        %834 = vmatpush.bf16.xpose.msra.mxu0 %v825
        %835 = vmatmul.bf16.gmra.mxu0 %v822
        %v836 = vpop.f32.mrf.mxu0
        %v837 = vadd.f32 0.0, %v836
        %v838 = vpop.f32.mrf.mxu0
        %839 = vdwg.mxu0
        %v841 = vunpack.c.l.b16 %v814
        %v842 = vpack.c.b16 %v841, %v841
        %843 = vrot.lane.b32.xlu0 %v842, 96
        %v844 = vpop.permute.xlu0 %843
        %v846 = vsel %vm820, %v814, 0
        %v849 = vsel %vm820, %v844, 0
        %851 = vmatpush.bf16.xpose.msra.mxu0 0
        %852 = vmatpush.bf16.xpose.msra.mxu0 0
        %853 = vmatpush.bf16.xpose.msra.mxu0 0
        %854 = vmatpush.bf16.xpose.msra.mxu0 0
        %855 = vmatpush.bf16.xpose.msra.mxu0 0
        %856 = vmatpush.bf16.xpose.msra.mxu0 0
        %857 = vmatpush.bf16.xpose.msra.mxu0 0
        %858 = vmatpush.bf16.xpose.msra.mxu0 %v849
        %859 = vmatmul.bf16.gmra.mxu0 %v846
        %v860 = vpop.f32.mrf.mxu0
        %v861 = vadd.f32 0.0, %v860
        %v862 = vpop.f32.mrf.mxu0
        %863 = vdwg.mxu0
        %v864 = vmul.f32 %v837, 0.35355338
        %v865 = vmul.f32 %v861, 0.35355338
        %v866 = vsel %vm703, 1, 0
        %v867 = vsel %vm704, 1, 0
        %v868 = vperm.slane %v866, 0
        %v869 = vperm.slane %v867, 0
        %vm870 = vcmp.eq.s32.totalorder %v868, 1
        %vm871 = vcmp.eq.s32.totalorder %v869, 1
        %v872 = vsel %vm870, %v864, -1e+09
        %v873 = vsel %vm871, %v865, -1e+09
        %v874 = vsel %vm820, %v872, -inf
        %875 = vmax.xlane.f32.xlu0 %v874
        %v876 = vpop.xlane.xlu0 %875
        %v877 = vsel %vm820, %v873, -inf
        %878 = vmax.xlane.f32.xlu0 %v877
        %v879 = vpop.xlane.xlu0 %878
        %v880 = vsub.f32 %v872, %v876
        %v881 = vsub.f32 %v873, %v879
        %v882 = vmul.f32 %v880, 1.442695
        %v883 = vpow.pop %v882
        %v884 = vmul.f32 %v881, 1.442695
        %v885 = vpow.pop %v884
        %v886 = vsel %vm820, %v883, 0.0
        %887 = vadd.xlane.f32.xlu0 %v886
        %v888 = vpop.xlane.xlu0 %887
        %v889 = vsel %vm820, %v885, 0.0
        %890 = vadd.xlane.f32.xlu0 %v889
        %v891 = vpop.xlane.xlu0 %890
        %v892 = vrcp.pop %v888
        %v893 = vrcp.pop %v891
        %v894 = vmul.f32 %v883, %v892
        %v895 = vmul.f32 %v885, %v893
        %v896 = vpack.c.bf16 %v894, %v894
        %v897 = vpack.c.bf16 %v895, %v895
        %898 = vrot.lane.b32.xlu0 %v817, 64
        %v899 = vpop.permute.xlu0 %898
        %v901 = vsel %vm820, %v896, 0
        %vm903 = vcmask 1043456
        %v905 = vsel %vm903, %v899, 0
        %907 = vmatpush.bf16.msra.mxu0 0
        %908 = vmatpush.bf16.msra.mxu0 0
        %909 = vmatpush.bf16.msra.mxu0 0
        %910 = vmatpush.bf16.msra.mxu0 0
        %911 = vmatpush.bf16.msra.mxu0 0
        %912 = vmatpush.bf16.msra.mxu0 0
        %913 = vmatpush.bf16.msra.mxu0 0
        %914 = vmatpush.bf16.msra.mxu0 %v905
        %915 = vmatmul.bf16.gmra.mxu0 %v901
        %v916 = vpop.f32.mrf.mxu0
        %v917 = vadd.f32 0.0, %v916
        %v918 = vpop.f32.mrf.mxu0
        %919 = vdwg.mxu0
        %920 = vrot.lane.b32.xlu0 %v842, 64
        %v921 = vpop.permute.xlu0 %920
        %v923 = vsel %vm820, %v897, 0
        %v926 = vsel %vm903, %v921, 0
        %928 = vmatpush.bf16.msra.mxu0 0
        %929 = vmatpush.bf16.msra.mxu0 0
        %930 = vmatpush.bf16.msra.mxu0 0
        %931 = vmatpush.bf16.msra.mxu0 0
        %932 = vmatpush.bf16.msra.mxu0 0
        %933 = vmatpush.bf16.msra.mxu0 0
        %934 = vmatpush.bf16.msra.mxu0 0
        %935 = vmatpush.bf16.msra.mxu0 %v926
        %936 = vmatmul.bf16.gmra.mxu0 %v923
        %v937 = vpop.f32.mrf.mxu0
        %v938 = vadd.f32 0.0, %v937
        %v939 = vpop.f32.mrf.mxu0
        %940 = vdwg.mxu0
        %941 = vrot.lane.b32.xlu0 %v817, 120
        %v942 = vpop.permute.xlu0 %941
        %943 = vrot.lane.b32.xlu0 %v817, 88
        %v944 = vpop.permute.xlu0 %943
        %v946 = vsel %vm820, %v942, 0
        %v949 = vsel %vm820, %v944, 0
        %951 = vmatpush.bf16.xpose.msra.mxu0 0
        %952 = vmatpush.bf16.xpose.msra.mxu0 0
        %953 = vmatpush.bf16.xpose.msra.mxu0 0
        %954 = vmatpush.bf16.xpose.msra.mxu0 0
        %955 = vmatpush.bf16.xpose.msra.mxu0 0
        %956 = vmatpush.bf16.xpose.msra.mxu0 0
        %957 = vmatpush.bf16.xpose.msra.mxu0 0
        %958 = vmatpush.bf16.xpose.msra.mxu0 %v949
        %959 = vmatmul.bf16.gmra.mxu0 %v946
        %v960 = vpop.f32.mrf.mxu0
        %v961 = vadd.f32 0.0, %v960
        %v962 = vpop.f32.mrf.mxu0
        %963 = vdwg.mxu0
        %964 = vrot.lane.b32.xlu0 %v842, 120
        %v965 = vpop.permute.xlu0 %964
        %966 = vrot.lane.b32.xlu0 %v842, 88
        %v967 = vpop.permute.xlu0 %966
        %v969 = vsel %vm820, %v965, 0
        %v972 = vsel %vm820, %v967, 0
        %974 = vmatpush.bf16.xpose.msra.mxu0 0
        %975 = vmatpush.bf16.xpose.msra.mxu0 0
        %976 = vmatpush.bf16.xpose.msra.mxu0 0
        %977 = vmatpush.bf16.xpose.msra.mxu0 0
        %978 = vmatpush.bf16.xpose.msra.mxu0 0
        %979 = vmatpush.bf16.xpose.msra.mxu0 0
        %980 = vmatpush.bf16.xpose.msra.mxu0 0
        %981 = vmatpush.bf16.xpose.msra.mxu0 %v972
        %982 = vmatmul.bf16.gmra.mxu0 %v969
        %v983 = vpop.f32.mrf.mxu0
        %v984 = vadd.f32 0.0, %v983
        %v985 = vpop.f32.mrf.mxu0
        %986 = vdwg.mxu0
        %v987 = vmul.f32 %v961, 0.35355338
        %v988 = vmul.f32 %v984, 0.35355338
        %v989 = vsel %vm870, %v987, -1e+09
        %v990 = vsel %vm871, %v988, -1e+09
        %v991 = vsel %vm820, %v989, -inf
        %992 = vmax.xlane.f32.xlu0 %v991
        %v993 = vpop.xlane.xlu0 %992
        %v994 = vsel %vm820, %v990, -inf
        %995 = vmax.xlane.f32.xlu0 %v994
        %v996 = vpop.xlane.xlu0 %995
        %v997 = vsub.f32 %v989, %v993
        %v998 = vsub.f32 %v990, %v996
        %v999 = vmul.f32 %v997, 1.442695
        %v1000 = vpow.pop %v999
        %v1001 = vmul.f32 %v998, 1.442695
        %v1002 = vpow.pop %v1001
        %v1003 = vsel %vm820, %v1000, 0.0
        %1004 = vadd.xlane.f32.xlu0 %v1003
        %v1005 = vpop.xlane.xlu0 %1004
        %v1006 = vsel %vm820, %v1002, 0.0
        %1007 = vadd.xlane.f32.xlu0 %v1006
        %v1008 = vpop.xlane.xlu0 %1007
        %v1009 = vrcp.pop %v1005
        %v1010 = vrcp.pop %v1008
        %v1011 = vmul.f32 %v1000, %v1009
        %v1012 = vmul.f32 %v1002, %v1010
        %v1013 = vpack.c.bf16 %v1011, %v1011
        %v1014 = vpack.c.bf16 %v1012, %v1012
        %1015 = vrot.lane.b32.xlu0 %v817, 56
        %v1016 = vpop.permute.xlu0 %1015
        %v1018 = vsel %vm820, %v1013, 0
        %v1021 = vsel %vm903, %v1016, 0
        %1023 = vmatpush.bf16.msra.mxu0 0
        %1024 = vmatpush.bf16.msra.mxu0 0
        %1025 = vmatpush.bf16.msra.mxu0 0
        %1026 = vmatpush.bf16.msra.mxu0 0
        %1027 = vmatpush.bf16.msra.mxu0 0
        %1028 = vmatpush.bf16.msra.mxu0 0
        %1029 = vmatpush.bf16.msra.mxu0 0
        %1030 = vmatpush.bf16.msra.mxu0 %v1021
        %1031 = vmatmul.bf16.gmra.mxu0 %v1018
        %v1032 = vpop.f32.mrf.mxu0
        %v1033 = vadd.f32 0.0, %v1032
        %v1034 = vpop.f32.mrf.mxu0
        %1035 = vdwg.mxu0
        %1036 = vrot.lane.b32.xlu0 %v842, 56
        %v1037 = vpop.permute.xlu0 %1036
        %v1039 = vsel %vm820, %v1014, 0
        %v1042 = vsel %vm903, %v1037, 0
        %1044 = vmatpush.bf16.msra.mxu0 0
        %1045 = vmatpush.bf16.msra.mxu0 0
        %1046 = vmatpush.bf16.msra.mxu0 0
        %1047 = vmatpush.bf16.msra.mxu0 0
        %1048 = vmatpush.bf16.msra.mxu0 0
        %1049 = vmatpush.bf16.msra.mxu0 0
        %1050 = vmatpush.bf16.msra.mxu0 0
        %1051 = vmatpush.bf16.msra.mxu0 %v1042
        %1052 = vmatmul.bf16.gmra.mxu0 %v1039
        %v1053 = vpop.f32.mrf.mxu0
        %v1054 = vadd.f32 0.0, %v1053
        %v1055 = vpop.f32.mrf.mxu0
        %1056 = vdwg.mxu0
        %1057 = vrot.lane.b32.xlu0 %v817, 112
        %v1058 = vpop.permute.xlu0 %1057
        %1059 = vrot.lane.b32.xlu0 %v817, 80
        %v1060 = vpop.permute.xlu0 %1059
        %v1062 = vsel %vm820, %v1058, 0
        %v1065 = vsel %vm820, %v1060, 0
        %1067 = vmatpush.bf16.xpose.msra.mxu0 0
        %1068 = vmatpush.bf16.xpose.msra.mxu0 0
        %1069 = vmatpush.bf16.xpose.msra.mxu0 0
        %1070 = vmatpush.bf16.xpose.msra.mxu0 0
        %1071 = vmatpush.bf16.xpose.msra.mxu0 0
        %1072 = vmatpush.bf16.xpose.msra.mxu0 0
        %1073 = vmatpush.bf16.xpose.msra.mxu0 0
        %1074 = vmatpush.bf16.xpose.msra.mxu0 %v1065
        %1075 = vmatmul.bf16.gmra.mxu0 %v1062
        %v1076 = vpop.f32.mrf.mxu0
        %v1077 = vadd.f32 0.0, %v1076
        %v1078 = vpop.f32.mrf.mxu0
        %1079 = vdwg.mxu0
        %1080 = vrot.lane.b32.xlu0 %v842, 112
        %v1081 = vpop.permute.xlu0 %1080
        %1082 = vrot.lane.b32.xlu0 %v842, 80
        %v1083 = vpop.permute.xlu0 %1082
        %v1085 = vsel %vm820, %v1081, 0
        %v1088 = vsel %vm820, %v1083, 0
        %1090 = vmatpush.bf16.xpose.msra.mxu0 0
        %1091 = vmatpush.bf16.xpose.msra.mxu0 0
        %1092 = vmatpush.bf16.xpose.msra.mxu0 0
        %1093 = vmatpush.bf16.xpose.msra.mxu0 0
        %1094 = vmatpush.bf16.xpose.msra.mxu0 0
        %1095 = vmatpush.bf16.xpose.msra.mxu0 0
        %1096 = vmatpush.bf16.xpose.msra.mxu0 0
        %1097 = vmatpush.bf16.xpose.msra.mxu0 %v1088
        %1098 = vmatmul.bf16.gmra.mxu0 %v1085
        %v1099 = vpop.f32.mrf.mxu0
        %v1100 = vadd.f32 0.0, %v1099
        %v1101 = vpop.f32.mrf.mxu0
        %1102 = vdwg.mxu0
        %v1103 = vmul.f32 %v1077, 0.35355338
        %v1104 = vmul.f32 %v1100, 0.35355338
        %v1105 = vsel %vm870, %v1103, -1e+09
        %v1106 = vsel %vm871, %v1104, -1e+09
        %v1107 = vsel %vm820, %v1105, -inf
        %1108 = vmax.xlane.f32.xlu0 %v1107
        %v1109 = vpop.xlane.xlu0 %1108
        %v1110 = vsel %vm820, %v1106, -inf
        %1111 = vmax.xlane.f32.xlu0 %v1110
        %v1112 = vpop.xlane.xlu0 %1111
        %v1113 = vsub.f32 %v1105, %v1109
        %v1114 = vsub.f32 %v1106, %v1112
        %v1115 = vmul.f32 %v1113, 1.442695
        %v1116 = vpow.pop %v1115
        %v1117 = vmul.f32 %v1114, 1.442695
        %v1118 = vpow.pop %v1117
        %v1119 = vsel %vm820, %v1116, 0.0
        %1120 = vadd.xlane.f32.xlu0 %v1119
        %v1121 = vpop.xlane.xlu0 %1120
        %v1122 = vsel %vm820, %v1118, 0.0
        %1123 = vadd.xlane.f32.xlu0 %v1122
        %v1124 = vpop.xlane.xlu0 %1123
        %v1125 = vrcp.pop %v1121
        %v1126 = vrcp.pop %v1124
        %v1127 = vmul.f32 %v1116, %v1125
        %v1128 = vmul.f32 %v1118, %v1126
        %v1129 = vpack.c.bf16 %v1127, %v1127
        %v1130 = vpack.c.bf16 %v1128, %v1128
        %1131 = vrot.lane.b32.xlu0 %v817, 48
        %v1132 = vpop.permute.xlu0 %1131
        %v1134 = vsel %vm820, %v1129, 0
        %v1137 = vsel %vm903, %v1132, 0
        %1139 = vmatpush.bf16.msra.mxu0 0
        %1140 = vmatpush.bf16.msra.mxu0 0
        %1141 = vmatpush.bf16.msra.mxu0 0
        %1142 = vmatpush.bf16.msra.mxu0 0
        %1143 = vmatpush.bf16.msra.mxu0 0
        %1144 = vmatpush.bf16.msra.mxu0 0
        %1145 = vmatpush.bf16.msra.mxu0 0
        %1146 = vmatpush.bf16.msra.mxu0 %v1137
        %1147 = vmatmul.bf16.gmra.mxu0 %v1134
        %v1148 = vpop.f32.mrf.mxu0
        %v1149 = vadd.f32 0.0, %v1148
        %v1150 = vpop.f32.mrf.mxu0
        %1151 = vdwg.mxu0
        %1152 = vrot.lane.b32.xlu0 %v842, 48
        %v1153 = vpop.permute.xlu0 %1152
        %v1155 = vsel %vm820, %v1130, 0
        %v1158 = vsel %vm903, %v1153, 0
        %1160 = vmatpush.bf16.msra.mxu0 0
        %1161 = vmatpush.bf16.msra.mxu0 0
        %1162 = vmatpush.bf16.msra.mxu0 0
        %1163 = vmatpush.bf16.msra.mxu0 0
        %1164 = vmatpush.bf16.msra.mxu0 0
        %1165 = vmatpush.bf16.msra.mxu0 0
        %1166 = vmatpush.bf16.msra.mxu0 0
        %1167 = vmatpush.bf16.msra.mxu0 %v1158
        %1168 = vmatmul.bf16.gmra.mxu0 %v1155
        %v1169 = vpop.f32.mrf.mxu0
        %v1170 = vadd.f32 0.0, %v1169
        %v1171 = vpop.f32.mrf.mxu0
        %1172 = vdwg.mxu0
        %1173 = vrot.lane.b32.xlu0 %v817, 104
        %v1174 = vpop.permute.xlu0 %1173
        %1175 = vrot.lane.b32.xlu0 %v817, 72
        %v1176 = vpop.permute.xlu0 %1175
        %v1178 = vsel %vm820, %v1174, 0
        %v1181 = vsel %vm820, %v1176, 0
        %1183 = vmatpush.bf16.xpose.msra.mxu0 0
        %1184 = vmatpush.bf16.xpose.msra.mxu0 0
        %1185 = vmatpush.bf16.xpose.msra.mxu0 0
        %1186 = vmatpush.bf16.xpose.msra.mxu0 0
        %1187 = vmatpush.bf16.xpose.msra.mxu0 0
        %1188 = vmatpush.bf16.xpose.msra.mxu0 0
        %1189 = vmatpush.bf16.xpose.msra.mxu0 0
        %1190 = vmatpush.bf16.xpose.msra.mxu0 %v1181
        %1191 = vmatmul.bf16.gmra.mxu0 %v1178
        %v1192 = vpop.f32.mrf.mxu0
        %v1193 = vadd.f32 0.0, %v1192
        %v1194 = vpop.f32.mrf.mxu0
        %1195 = vdwg.mxu0
        %1196 = vrot.lane.b32.xlu0 %v842, 104
        %v1197 = vpop.permute.xlu0 %1196
        %1198 = vrot.lane.b32.xlu0 %v842, 72
        %v1199 = vpop.permute.xlu0 %1198
        %v1201 = vsel %vm820, %v1197, 0
        %v1204 = vsel %vm820, %v1199, 0
        %1206 = vmatpush.bf16.xpose.msra.mxu0 0
        %1207 = vmatpush.bf16.xpose.msra.mxu0 0
        %1208 = vmatpush.bf16.xpose.msra.mxu0 0
        %1209 = vmatpush.bf16.xpose.msra.mxu0 0
        %1210 = vmatpush.bf16.xpose.msra.mxu0 0
        %1211 = vmatpush.bf16.xpose.msra.mxu0 0
        %1212 = vmatpush.bf16.xpose.msra.mxu0 0
        %1213 = vmatpush.bf16.xpose.msra.mxu0 %v1204
        %1214 = vmatmul.bf16.gmra.mxu0 %v1201
        %v1215 = vpop.f32.mrf.mxu0
        %v1216 = vadd.f32 0.0, %v1215
        %v1217 = vpop.f32.mrf.mxu0
        %1218 = vdwg.mxu0
        %v1219 = vmul.f32 %v1193, 0.35355338
        %v1220 = vmul.f32 %v1216, 0.35355338
        %v1221 = vsel %vm870, %v1219, -1e+09
        %v1222 = vsel %vm871, %v1220, -1e+09
        %v1223 = vsel %vm820, %v1221, -inf
        %1224 = vmax.xlane.f32.xlu0 %v1223
        %v1225 = vpop.xlane.xlu0 %1224
        %v1226 = vsel %vm820, %v1222, -inf
        %1227 = vmax.xlane.f32.xlu0 %v1226
        %v1228 = vpop.xlane.xlu0 %1227
        %v1229 = vsub.f32 %v1221, %v1225
        %v1230 = vsub.f32 %v1222, %v1228
        %v1231 = vmul.f32 %v1229, 1.442695
        %v1232 = vpow.pop %v1231
        %v1233 = vmul.f32 %v1230, 1.442695
        %v1234 = vpow.pop %v1233
        %v1235 = vsel %vm820, %v1232, 0.0
        %1236 = vadd.xlane.f32.xlu0 %v1235
        %v1237 = vpop.xlane.xlu0 %1236
        %v1238 = vsel %vm820, %v1234, 0.0
        %1239 = vadd.xlane.f32.xlu0 %v1238
        %v1240 = vpop.xlane.xlu0 %1239
        %v1241 = vrcp.pop %v1237
        %v1242 = vrcp.pop %v1240
        %v1243 = vmul.f32 %v1232, %v1241
        %v1244 = vmul.f32 %v1234, %v1242
        %v1245 = vpack.c.bf16 %v1243, %v1243
        %v1246 = vpack.c.bf16 %v1244, %v1244
        %1247 = vrot.lane.b32.xlu0 %v817, 40
        %v1248 = vpop.permute.xlu0 %1247
        %v1250 = vsel %vm820, %v1245, 0
        %v1253 = vsel %vm903, %v1248, 0
        %1255 = vmatpush.bf16.msra.mxu0 0
        %1256 = vmatpush.bf16.msra.mxu0 0
        %1257 = vmatpush.bf16.msra.mxu0 0
        %1258 = vmatpush.bf16.msra.mxu0 0
        %1259 = vmatpush.bf16.msra.mxu0 0
        %1260 = vmatpush.bf16.msra.mxu0 0
        %1261 = vmatpush.bf16.msra.mxu0 0
        %1262 = vmatpush.bf16.msra.mxu0 %v1253
        %1263 = vmatmul.bf16.gmra.mxu0 %v1250
        %v1264 = vpop.f32.mrf.mxu0
        %v1265 = vadd.f32 0.0, %v1264
        %v1266 = vpop.f32.mrf.mxu0
        %1267 = vdwg.mxu0
        %1268 = vrot.lane.b32.xlu0 %v842, 40
        %v1269 = vpop.permute.xlu0 %1268
        %v1271 = vsel %vm820, %v1246, 0
        %v1274 = vsel %vm903, %v1269, 0
        %1276 = vmatpush.bf16.msra.mxu0 0
        %1277 = vmatpush.bf16.msra.mxu0 0
        %1278 = vmatpush.bf16.msra.mxu0 0
        %1279 = vmatpush.bf16.msra.mxu0 0
        %1280 = vmatpush.bf16.msra.mxu0 0
        %1281 = vmatpush.bf16.msra.mxu0 0
        %1282 = vmatpush.bf16.msra.mxu0 0
        %1283 = vmatpush.bf16.msra.mxu0 %v1274
        %1284 = vmatmul.bf16.gmra.mxu0 %v1271
        %v1285 = vpop.f32.mrf.mxu0
        %v1286 = vadd.f32 0.0, %v1285
        %v1287 = vpop.f32.mrf.mxu0
        %1288 = vdwg.mxu0
        %1291 = vrot.lane.b32.xlu0 %v1033, 8
        %v1292 = vpop.permute.xlu0 %1291
        %1293 = vrot.lane.b32.xlu0 %v1054, 8
        %v1294 = vpop.permute.xlu0 %1293
        %1299 = vrot.lane.b32.xlu0 %v1149, 16
        %v1300 = vpop.permute.xlu0 %1299
        %1301 = vrot.lane.b32.xlu0 %v1170, 16
        %v1302 = vpop.permute.xlu0 %1301
        %1307 = vrot.lane.b32.xlu0 %v1265, 24
        %v1308 = vpop.permute.xlu0 %1307
        %1309 = vrot.lane.b32.xlu0 %v1286, 24
        %v1310 = vpop.permute.xlu0 %1309
        %v1313 = vsel %vm820, %v917, %v1292
        %v1314 = vsel %vm820, %v938, %v1294
        %vm1315 = vcmask 130048
        %v1316 = vsel %vm1315, %v1313, %v1300
        %v1317 = vsel %vm1315, %v1314, %v1302
        %vm1318 = vcmask 195584
        %v1319 = vsel %vm1318, %v1316, %v1308
        %v1320 = vsel %vm1318, %v1317, %v1310
        %v1321 = vpack.c.bf16 %v1320, %v1319
        %v1322 = vld [vmem:[%s652] sm:$0xf]
        %v1323 = vld [vmem:[%s652 + $0x4] sm:$0xf]
        %v1324 = vld [vmem:[%s652 + $0x8] sm:$0xf]
        %v1325 = vld [vmem:[%s652 + $0xc] sm:$0xf]
        %v1326 = vld [vmem:[%s655] sm:$0x1]
        %v1328 = vperm.slane %v1326, 0
        %v1334 = vunpack.c.l.b16 %v1322
        %v1335 = vunpack.c.l.b16 %v1323
        %v1336 = vunpack.c.l.b16 %v1324
        %v1337 = vunpack.c.l.b16 %v1325
        %v1338 = vpack.c.b16 %v1335, %v1334
        %v1339 = vpack.c.b16 %v1337, %v1336
        %v1343 = vsel %vm707, %v1321, 0
        %1345 = vmatpush.bf16.msra.mxu0 0
        %1346 = vmatpush.bf16.msra.mxu0 0
        %1347 = vmatpush.bf16.msra.mxu0 0
        %1348 = vmatpush.bf16.msra.mxu0 0
        %1349 = vmatpush.bf16.msra.mxu0 0
        %1350 = vmatpush.bf16.msra.mxu0 0
        %1351 = vmatpush.bf16.msra.mxu0 %v1339
        %1352 = vmatpush.bf16.msra.mxu0 %v1338
        %1353 = vmatmul.bf16.gmra.mxu0 %v1343
        %v1354 = vpop.f32.mrf.mxu0
        %v1355 = vadd.f32 %v1328, %v1354
        %v1356 = vpop.f32.mrf.mxu0
        %v1357 = vadd.f32 %v1328, %v1356
        %1358 = vdwg.mxu0
        %v1359 = vadd.f32 %v697, %v1355
        %v1360 = vadd.f32 %v698, %v1357
        %v1361 = vld [vmem:[%s664] sm:$0x1]
        %v1362 = vld [vmem:[%s667] sm:$0x1]
        %v1363 = vsel %vm707, %v1359, 0.0
        %1364 = vadd.xlane.f32.xlu0 %v1363
        %v1365 = vpop.xlane.xlu0 %1364
        %v1366 = vsel %vm707, %v1360, 0.0
        %1367 = vadd.xlane.f32.xlu0 %v1366
        %v1368 = vpop.xlane.xlu0 %1367
        %v1369 = vmul.f32 %v1365, %v720
        %v1370 = vmul.f32 %v1368, %v720
        %v1371 = vsub.f32 %v1359, %v1369
        %v1372 = vsub.f32 %v1360, %v1370
        %v1373 = vmul.f32 %v1371, %v1371
        %v1374 = vmul.f32 %v1372, %v1372
        %v1375 = vsel %vm707, %v1373, 0.0
        %1376 = vadd.xlane.f32.xlu0 %v1375
        %v1377 = vpop.xlane.xlu0 %1376
        %v1378 = vsel %vm707, %v1374, 0.0
        %1379 = vadd.xlane.f32.xlu0 %v1378
        %v1380 = vpop.xlane.xlu0 %1379
        %v1381 = vmul.f32 %v1377, 0.032258064
        %v1382 = vmul.f32 %v1380, 0.032258064
        %v1384 = vperm.slane %v1361, 0
        %v1386 = vmul.f32 %v1384, %v1371
        %v1387 = vmul.f32 %v1384, %v1372
        %v1388 = vrsqrt.pop %v1381
        %v1389 = vmul.f32 %v1388, %v1381
        %v1390 = vmul.f32 %v1389, %v1388
        %v1391 = vmul.f32 0.5, %v1390
        %v1392 = vsub.f32 1.5, %v1391
        %v1393 = vmul.f32 %v1388, %v1392
        %v1394 = vmul.f32 %v1381, %v1393
        %vm1395 = vcmp.eq.f32.partialorder %v1381, inf
        %v1396 = vsel %vm1395, %v1381, %v1394
        %vm1397 = vcmp.eq.f32.partialorder %v1381, 0.0
        %v1398 = vand.u32 %v1381, 2147483648
        %v1399 = vsel %vm1397, %v1398, %v1396
        %v1400 = vrsqrt.pop %v1382
        %v1401 = vmul.f32 %v1400, %v1382
        %v1402 = vmul.f32 %v1401, %v1400
        %v1403 = vmul.f32 0.5, %v1402
        %v1404 = vsub.f32 1.5, %v1403
        %v1405 = vmul.f32 %v1400, %v1404
        %v1406 = vmul.f32 %v1382, %v1405
        %vm1407 = vcmp.eq.f32.partialorder %v1382, inf
        %v1408 = vsel %vm1407, %v1382, %v1406
        %vm1409 = vcmp.eq.f32.partialorder %v1382, 0.0
        %v1410 = vand.u32 %v1382, 2147483648
        %v1411 = vsel %vm1409, %v1410, %v1408
        %v1412 = vadd.f32 %v1399, 1e-06
        %v1413 = vadd.f32 %v1411, 1e-06
        %v1414 = vrcp.pop %v1412
        %v1415 = vrcp.pop %v1413
        %v1416 = vmul.f32 %v1386, %v1414
        %v1417 = vmul.f32 %v1387, %v1415
        %v1419 = vperm.slane %v1362, 0
        %v1421 = vadd.f32 %v1416, %v1419
        %v1422 = vadd.f32 %v1417, %v1419
        %v1423 = vpack.c.bf16 %v1422, %v1421
        %v1424 = vld [vmem:[%s672] sm:$0xf]
        %v1425 = vld [vmem:[%s672 + $0x4] sm:$0xf]
        %v1426 = vld [vmem:[%s672 + $0x8] sm:$0xf]
        %v1427 = vld [vmem:[%s672 + $0xc] sm:$0xf]
        %v1428 = vld [vmem:[%s675] sm:$0x1]
        %v1430 = vperm.slane %v1428, 0
        %v1436 = vunpack.c.l.b16 %v1424
        %v1437 = vunpack.c.l.b16 %v1425
        %v1438 = vunpack.c.l.b16 %v1426
        %v1439 = vunpack.c.l.b16 %v1427
        %v1440 = vpack.c.b16 %v1437, %v1436
        %v1441 = vpack.c.b16 %v1439, %v1438
        %v1445 = vsel %vm707, %v1423, 0
        %1447 = vmatpush.bf16.msra.mxu0 0
        %1448 = vmatpush.bf16.msra.mxu0 0
        %1449 = vmatpush.bf16.msra.mxu0 0
        %1450 = vmatpush.bf16.msra.mxu0 0
        %1451 = vmatpush.bf16.msra.mxu0 0
        %1452 = vmatpush.bf16.msra.mxu0 0
        %1453 = vmatpush.bf16.msra.mxu0 %v1441
        %1454 = vmatpush.bf16.msra.mxu0 %v1440
        %1455 = vmatmul.bf16.gmra.mxu0 %v1445
        %v1456 = vpop.f32.mrf.mxu0
        %v1457 = vadd.f32 %v1430, %v1456
        %v1458 = vpop.f32.mrf.mxu0
        %v1459 = vadd.f32 %v1430, %v1458
        %1460 = vdwg.mxu0
        %v1461 = vmul.f32 %v1457, 0.5
        %v1462 = vmul.f32 %v1459, 0.5
        %v1463 = vmul.f32 %v1457, %v1457
        %v1464 = vmul.f32 %v1459, %v1459
        %v1465 = vmul.f32 %v1457, %v1463
        %v1466 = vmul.f32 %v1459, %v1464
        %v1467 = vmul.f32 %v1465, 0.044715
        %v1468 = vmul.f32 %v1466, 0.044715
        %v1469 = vadd.f32 %v1457, %v1467
        %v1470 = vadd.f32 %v1459, %v1468
        %v1471 = vmul.f32 %v1469, 0.7978846
        %v1472 = vmul.f32 %v1470, 0.7978846
        %v1473 = vtanh.pop %v1471
        %v1474 = vtanh.pop %v1472
        %v1475 = vadd.f32 %v1473, 1.0
        %v1476 = vadd.f32 %v1474, 1.0
        %v1477 = vmul.f32 %v1461, %v1475
        %v1478 = vmul.f32 %v1462, %v1476
        %v1479 = vpack.c.bf16 %v1478, %v1477
        %v1480 = vld [vmem:[%s680] sm:$0xf]
        %v1481 = vld [vmem:[%s680 + $0x4] sm:$0xf]
        %v1482 = vld [vmem:[%s680 + $0x8] sm:$0xf]
        %v1483 = vld [vmem:[%s680 + $0xc] sm:$0xf]
        %v1484 = vld [vmem:[%s680 + $0x10] sm:$0xf]
        %v1485 = vld [vmem:[%s680 + $0x14] sm:$0xf]
        %v1486 = vld [vmem:[%s680 + $0x18] sm:$0xf]
        %v1487 = vld [vmem:[%s680 + $0x1c] sm:$0xf]
        %v1488 = vld [vmem:[%s680 + $0x20] sm:$0xf]
        %v1489 = vld [vmem:[%s680 + $0x24] sm:$0xf]
        %v1490 = vld [vmem:[%s680 + $0x28] sm:$0xf]
        %v1491 = vld [vmem:[%s680 + $0x2c] sm:$0xf]
        %v1492 = vld [vmem:[%s680 + $0x30] sm:$0xf]
        %v1493 = vld [vmem:[%s680 + $0x34] sm:$0xf]
        %v1494 = vld [vmem:[%s680 + $0x38] sm:$0xf]
        %v1495 = vld [vmem:[%s680 + $0x3c] sm:$0xf]
        %v1496 = vld [vmem:[%s683] sm:$0x1]
        %v1498 = vperm.slane %v1496, 0
        %v1516 = vunpack.c.l.b16 %v1480
        %v1517 = vunpack.c.l.b16 %v1481
        %v1518 = vunpack.c.l.b16 %v1482
        %v1519 = vunpack.c.l.b16 %v1483
        %v1520 = vunpack.c.l.b16 %v1484
        %v1521 = vunpack.c.l.b16 %v1485
        %v1522 = vunpack.c.l.b16 %v1486
        %v1523 = vunpack.c.l.b16 %v1487
        %v1524 = vunpack.c.l.b16 %v1488
        %v1525 = vunpack.c.l.b16 %v1489
        %v1526 = vunpack.c.l.b16 %v1490
        %v1527 = vunpack.c.l.b16 %v1491
        %v1528 = vunpack.c.l.b16 %v1492
        %v1529 = vunpack.c.l.b16 %v1493
        %v1530 = vunpack.c.l.b16 %v1494
        %v1531 = vunpack.c.l.b16 %v1495
        %v1532 = vpack.c.b16 %v1517, %v1516
        %v1533 = vpack.c.b16 %v1519, %v1518
        %v1534 = vpack.c.b16 %v1521, %v1520
        %v1535 = vpack.c.b16 %v1523, %v1522
        %v1536 = vpack.c.b16 %v1525, %v1524
        %v1537 = vpack.c.b16 %v1527, %v1526
        %v1538 = vpack.c.b16 %v1529, %v1528
        %v1539 = vpack.c.b16 %v1531, %v1530
        %1548 = vmatpush.bf16.msra.mxu0 %v1539
        %1549 = vmatpush.bf16.msra.mxu0 %v1538
        %1550 = vmatpush.bf16.msra.mxu0 %v1537
        %1551 = vmatpush.bf16.msra.mxu0 %v1536
        %1552 = vmatpush.bf16.msra.mxu0 %v1535
        %1553 = vmatpush.bf16.msra.mxu0 %v1534
        %1554 = vmatpush.bf16.msra.mxu0 %v1533
        %1555 = vmatpush.bf16.msra.mxu0 %v1532
        %1556 = vmatmul.bf16.gmra.mxu0 %v1479
        %v1557 = vpop.f32.mrf.mxu0
        %v1558 = vadd.f32 %v1498, %v1557
        %v1559 = vpop.f32.mrf.mxu0
        %v1560 = vadd.f32 %v1498, %v1559
        %1561 = vdwg.mxu0
        %v1562 = vadd.f32 %v1359, %v1558
        %v1563 = vadd.f32 %v1360, %v1560
        %1564 = vst.msk [vmem:[#allocation2] sm:$0xff] %vm707, %v1562
        %1565 = vst.msk [vmem:[#allocation2 + $0x8] sm:$0xff] %vm707, %v1563
        // Predicated region
        $region81: #{tpu_custom_call.1} parent=75 // pred_check
          %p1566 = pneg %p420
        $region82: #{tpu_custom_call.1} parent=75 // pred_check_branch
          %1568 = sbr.rel (%p1566) target = $region84
        $region83: #{tpu_custom_call.1} parent=75 // pred_region
          %s1569 = smul.u32 2, %s30
          %1571 = vsyncadd [#allocation3], 0
          %s1572 = smul.addr %s1569, 8
          %s1573 = scalar_lea.hbm %s14, %s1572
          %s1574 = sshll.u32 [#allocation2], 4
          %s1575 = int_to_ptr.vmem [resolvable:$true] %s1574
          %s1576 = sshll.u32 %s1573, 4
          %s1577 = int_to_ptr.hbm [resolvable:$true] %s1576
          %1582 = dma.vmem_to_hbm [thread:$0]  %s1575, 256, %s1577, [#allocation3], 128, 128, 8
        $region84: #{tpu_custom_call.1} parent=75 // pred_fallthru
          _
        // Predicated region
        $region85: #{tpu_custom_call.1} parent=75 // pred_check
          %p1583 = pneg %p420
        $region86: #{tpu_custom_call.1} parent=75 // pred_check_branch
          %1585 = sbr.rel (%p1583) target = $region88
        $region87: #{tpu_custom_call.1} parent=75 // pred_region
          %1587 = dma.done [#allocation3], 256
        $region88: #{tpu_custom_call.1} parent=75 // pred_fallthru
          _
      $region76: #{tpu_custom_call.1} parent=5 // pred_fallthru
        _
      %p1588 = scmp.le.s32.totalorder 2, %s21
      // Predicated region
      $region89: #{tpu_custom_call.1} parent=5 // pred_check
        %p1589 = pneg %p1588
      $region90: #{tpu_custom_call.1} parent=5 // pred_check_branch
        %1591 = sbr.rel (%p1589) target = $region92
      $region91: #{tpu_custom_call.1} parent=5 // pred_region
        %s1592 = ssub.s32 %s21, 2
      $region92: #{tpu_custom_call.1} parent=5 // pred_fallthru
        _
    $region6: #{tpu_custom_call.1} parent=1 // loop_footer
      %s25 = sadd.s32 1, %s21
    $region7: #{tpu_custom_call.1} parent=1 // loop_footer_branch
      %20 = sbr.rel target = $region3
    $region8: #{tpu_custom_call.1} parent=1 // loop_exit
      _
    %1593 = vsyncpa [#allocation3], 1
    %s1594 = scalar_lea.sflag [#allocation3], 1
    %1595 = vsyncpa %s1594, 1

</llo_original>
